<compile_context>
chip_gen: v5e
topology: v5e:2x2
jax: 0.10.0
libtpu: 0.0.40
codegen_flags: <defaults>
</compile_context>

<pallas_src>
import functools

import jax
import jax.numpy as jnp
from jax.experimental import pallas as pl
from jax.experimental.pallas import tpu as pltpu

HIDDEN = 50   # logical hidden size (PyTorch nn.LSTM(input_dim, 50))
HP = 128      # lane-padded hidden size: one full 128-lane slab per gate

# Raw/PyTorch gate order is [i, f, g, o]; kernel slab order is [i, f, o, g] so that
# sigmoid covers one contiguous 3*HP slab and tanh the last HP slab.
GATE_PERM = (0, 1, 3, 2)   # kernel slot -> raw gate index


# ----------------------------------------------------------------------------
# Fused kernel: input projection + both LSTM layers + Linear(50,1) + Sigmoid.
# x_ref is time-major flattened: row index = t*B + b.
# ----------------------------------------------------------------------------
def fused_lstm_kernel(x_ref, w_ih1_ref, b1_ref, w_hh1_ref, w2_ref, b2_ref,
                      w_fc_ref, b_fc_ref, o_ref, *, T, B):
    hp = w_hh1_ref.shape[0]   # lane-padded hidden size (128)

    # ---- layer-1 input projection for ALL timesteps in one MXU pass (b1 folded) ----
    xproj = (jnp.dot(x_ref[...].astype(jnp.bfloat16), w_ih1_ref[...],
                     preferred_element_type=jnp.float32)
             + b1_ref[...])                                   # (T*B, 4*hp) f32

    # Hoist the layer-2 bias broadcast once (not re-emitted 8x in the unrolled loop).
    b2 = jnp.broadcast_to(b2_ref[...], (B, 4 * hp))           # (B, 4*hp) f32

    def act(gates, c):
        # Kernel gate layout [i, f, o, g]: one sigmoid slab + one tanh slab.
        # sigmoid(x) = 0.5*(tanh(0.5*x) + 1)  -> single EUP launch for i/f/o.
        sfo = 0.5 * (jnp.tanh(0.5 * gates[:, :3 * hp]) + 1.0)  # (B, 3*hp)
        i_g = sfo[:, 0 * hp:1 * hp]
        f_g = sfo[:, 1 * hp:2 * hp]
        o_g = sfo[:, 2 * hp:3 * hp]
        g_g = jnp.tanh(gates[:, 3 * hp:4 * hp])
        c_new = f_g * c + i_g * g_g
        h_new = o_g * jnp.tanh(c_new)
        return h_new, c_new

    zeros = jnp.zeros((B, hp), jnp.float32)
    h1, c1, h2, c2 = zeros, zeros, zeros, zeros

    # T is small & static -> fully unrolled.  Weights are read from their refs at the
    # dot sites (streamed from VMEM per use, no 64-vreg live ranges).
    for t in range(T):
        # ---- layer 1: only the recurrent matmul is on the serial chain ----
        g1 = (jnp.dot(h1.astype(jnp.bfloat16), w_hh1_ref[...],
                      preferred_element_type=jnp.float32)
              + xproj[t * B:(t + 1) * B, :])
        h1, c1 = act(g1, c1)

        # Dropout(0.2) is identity in eval mode.
        # TODO(synk): training-mode dropout (PRNG mask) not implemented.

        # ---- layer 2: one merged (B, 2*hp) @ (2*hp, 4*hp) MXU pass ----
        g2 = (jnp.dot(jnp.concatenate([h1, h2], axis=-1).astype(jnp.bfloat16),
                      w2_ref[...], preferred_element_type=jnp.float32)
              + b2)
        h2, c2 = act(g2, c2)

    # Linear(50 -> 1) + Sigmoid on the last hidden state as VPU mul + lane reduction;
    # dead (padded) lanes of h2 are exactly zero and w_fc is zero there too.
    z = jnp.sum(h2 * w_fc_ref[...], axis=-1, keepdims=True) + b_fc_ref[...]
    o_ref[...] = jax.nn.sigmoid(z)


# ----------------------------------------------------------------------------
# Wrapper: one pallas_call, everything whole-array resident in VMEM (< 1 MiB).
# ----------------------------------------------------------------------------
@jax.jit
def lstm_model_forward(x_btd, params):
    B, T, D = x_btd.shape
    # Time-major flatten so the precomputed projection slices per-timestep rows:
    # row index = t*B + b.
    x_flat = jnp.transpose(x_btd.astype(jnp.float32), (1, 0, 2)).reshape(T * B, D)
    vmem = pl.BlockSpec(memory_space=pltpu.MemorySpace.VMEM)
    kernel = functools.partial(fused_lstm_kernel, T=T, B=B)
    return pl.pallas_call(
        kernel,
        out_shape=jax.ShapeDtypeStruct((B, 1), jnp.float32),
        in_specs=[vmem] * 8,
        out_specs=vmem,
        # VMEM footprint: bf16 weights (16+128+256 KiB) + f32 biases + x  < 1 MiB,
        # far under the scoped default on v5e/v6e/v7x -> no vmem_limit needed.
    )(x_flat,
      params["w_ih1"], params["b1"], params["w_hh1"],
      params["w2"], params["b2"], params["w_fc"], params["b_fc"])


# ----------------------------------------------------------------------------
# Parameter init (PyTorch-style uniform) + padding/packing for the kernel.
# ----------------------------------------------------------------------------
def pack_params(raw, h=HIDDEN, hp=HP):
    def gate_cols(w):            # (rows, 4h) [i,f,g,o] -> (rows, 4hp) [i,f,o,g]
        out = jnp.zeros((w.shape[0], 4 * hp), jnp.float32)
        for slot, g in enumerate(GATE_PERM):
            out = out.at[:, slot * hp:slot * hp + h].set(w[:, g * h:(g + 1) * h])
        return out

    def pad_rows(w, nrows):      # (r, cols) -> (nrows, cols), zero-padded rows
        return jnp.zeros((nrows, w.shape[1]), jnp.float32).at[:w.shape[0], :].set(w)

    # Merged layer-2 weight: [W_ih2 ; W_hh2]  -> (2*hp, 4*hp)
    w2 = jnp.concatenate([pad_rows(gate_cols(raw["w_ih2"]), hp),
                          pad_rows(gate_cols(raw["w_hh2"]), hp)], axis=0)

    return {
        "w_ih1": gate_cols(raw["w_ih1"]).astype(jnp.bfloat16),            # (D,    4*HP)
        "b1":    gate_cols(raw["b1"]),                                    # (1,    4*HP) f32
        "w_hh1": pad_rows(gate_cols(raw["w_hh1"]), hp).astype(jnp.bfloat16),  # (HP, 4*HP)
        "w2":    w2.astype(jnp.bfloat16),                                 # (2*HP, 4*HP)
        "b2":    gate_cols(raw["b2"]),                                    # (1,    4*HP) f32
        "w_fc":  jnp.zeros((1, hp), jnp.float32).at[0, :h].set(raw["w_fc"][:, 0]),
        "b_fc":  raw["b_fc"],                                             # (1, 1)
    }


def init_params(key, input_dim, hidden=HIDDEN, hp=HP):
    ks = jax.random.split(key, 10)
    bound = 1.0 / (hidden ** 0.5)

    def u(k, shape):
        return jax.random.uniform(k, shape, jnp.float32, -bound, bound)

    raw = {
        # stored pre-transposed (in_features, 4H) so kernels/ref do x @ W
        "w_ih1": u(ks[0], (input_dim, 4 * hidden)),
        "w_hh1": u(ks[1], (hidden, 4 * hidden)),
        "b1":    u(ks[2], (1, 4 * hidden)) + u(ks[3], (1, 4 * hidden)),   # b_ih + b_hh
        "w_ih2": u(ks[4], (hidden, 4 * hidden)),
        "w_hh2": u(ks[5], (hidden, 4 * hidden)),
        "b2":    u(ks[6], (1, 4 * hidden)) + u(ks[7], (1, 4 * hidden)),
        "w_fc":  u(ks[8], (hidden, 1)),
        "b_fc":  u(ks[9], (1, 1)),
    }
    return raw, pack_params(raw, hidden, hp)


# Pure-JAX reference (unpadded, f32, PyTorch gate order) for correctness check.
def lstm_ref_forward(x, p, hidden=HIDDEN):
    B, T, _ = x.shape

    def cell(x_t, h, c, w_ih, w_hh, b):
        g = x_t @ w_ih + h @ w_hh + b
        i = jax.nn.sigmoid(g[:, 0 * hidden:1 * hidden])
        f = jax.nn.sigmoid(g[:, 1 * hidden:2 * hidden])
        gg = jnp.tanh(g[:, 2 * hidden:3 * hidden])
        o = jax.nn.sigmoid(g[:, 3 * hidden:4 * hidden])
        c = f * c + i * gg
        return o * jnp.tanh(c), c

    h1 = c1 = h2 = c2 = jnp.zeros((B, hidden), jnp.float32)
    for t in range(T):
        h1, c1 = cell(x[:, t, :], h1, c1, p["w_ih1"], p["w_hh1"], p["b1"])
        h2, c2 = cell(h1, h2, c2, p["w_ih2"], p["w_hh2"], p["b2"])
    return jax.nn.sigmoid(h2 @ p["w_fc"] + p["b_fc"])


if __name__ == "__main__":
    B, T, D = 2, 8, 16
    key = jax.random.PRNGKey(0)
    kx, kp = jax.random.split(key)
    x = jax.random.normal(kx, (B, T, D), jnp.float32)
    raw_params, packed_params = init_params(kp, D)

    out = jax.block_until_ready(lstm_model_forward(x, packed_params))
    assert out.shape == (B, 1) and out.dtype == jnp.float32

    ref = lstm_ref_forward(x, raw_params)
    # bf16 MXU operands -> slightly looser tolerance than pure-f32.
    assert jnp.allclose(out, ref, atol=2e-2), (out, ref)
    print("KERNEL_OK")
</pallas_src>

<mosaic_0001>
module attributes {stable_mosaic.version = 11 : i64} {
  func.func @fused_lstm_kernel(%arg0: memref<16x16xf32, #tpu.memory_space<vmem>>, %arg1: memref<16x512xbf16, #tpu.memory_space<vmem>>, %arg2: memref<1x512xf32, #tpu.memory_space<vmem>>, %arg3: memref<128x512xbf16, #tpu.memory_space<vmem>>, %arg4: memref<256x512xbf16, #tpu.memory_space<vmem>>, %arg5: memref<1x512xf32, #tpu.memory_space<vmem>>, %arg6: memref<1x128xf32, #tpu.memory_space<vmem>>, %arg7: memref<1x1xf32, #tpu.memory_space<vmem>>, %arg8: memref<2x1xf32, #tpu.memory_space<vmem>>) attributes {dimension_semantics = [], scalar_prefetch = 0 : i64, scratch_operands = 0 : i64, tpu.core_type = #tpu.core_type<tc>} {
    %c0 = arith.constant 0 : index
    %c0_0 = arith.constant 0 : index
    %0 = vector.load %arg0[%c0, %c0_0] : memref<16x16xf32, #tpu.memory_space<vmem>>, vector<16x16xf32>
    %1 = arith.truncf %0 : vector<16x16xf32> to vector<16x16xbf16>
    %c0_1 = arith.constant 0 : index
    %c0_2 = arith.constant 0 : index
    %2 = vector.load %arg1[%c0_1, %c0_2] : memref<16x512xbf16, #tpu.memory_space<vmem>>, vector<16x512xbf16>
    %cst = arith.constant dense<0.000000e+00> : vector<16x512xf32>
    %3 = tpu.matmul %1, %2, %cst {dimension_numbers = #tpu.dot_dimension_numbers<[1], [0], [0], [1], [0, 0, 1, 1], [], []>} : vector<16x16xbf16>, vector<16x512xbf16>, vector<16x512xf32> -> vector<16x512xf32>
    %c0_3 = arith.constant 0 : index
    %c0_4 = arith.constant 0 : index
    %4 = vector.load %arg2[%c0_3, %c0_4] : memref<1x512xf32, #tpu.memory_space<vmem>>, vector<1x512xf32>
    %5 = vector.broadcast %4 : vector<1x512xf32> to vector<16x512xf32>
    %6 = arith.addf %3, %5 : vector<16x512xf32>
    %c0_5 = arith.constant 0 : index
    %c0_6 = arith.constant 0 : index
    %7 = vector.load %arg5[%c0_5, %c0_6] : memref<1x512xf32, #tpu.memory_space<vmem>>, vector<1x512xf32>
    %8 = vector.shape_cast %7 : vector<1x512xf32> to vector<1x512xf32>
    %9 = vector.broadcast %8 : vector<1x512xf32> to vector<2x512xf32>
    %cst_7 = arith.constant 0.000000e+00 : f32
    %10 = vector.broadcast %cst_7 : f32 to vector<2x128xf32>
    %11 = arith.truncf %10 : vector<2x128xf32> to vector<2x128xbf16>
    %c0_8 = arith.constant 0 : index
    %c0_9 = arith.constant 0 : index
    %12 = vector.load %arg3[%c0_8, %c0_9] : memref<128x512xbf16, #tpu.memory_space<vmem>>, vector<128x512xbf16>
    %cst_10 = arith.constant dense<0.000000e+00> : vector<2x512xf32>
    %13 = tpu.matmul %11, %12, %cst_10 {dimension_numbers = #tpu.dot_dimension_numbers<[1], [0], [0], [1], [0, 0, 1, 1], [], []>} : vector<2x128xbf16>, vector<128x512xbf16>, vector<2x512xf32> -> vector<2x512xf32>
    %14 = vector.extract_strided_slice %6 {offsets = [0, 0], sizes = [2, 512], strides = [1, 1]} : vector<16x512xf32> to vector<2x512xf32>
    %15 = arith.addf %13, %14 : vector<2x512xf32>
    %16 = vector.extract_strided_slice %15 {offsets = [0, 0], sizes = [2, 384], strides = [1, 1]} : vector<2x512xf32> to vector<2x384xf32>
    %cst_11 = arith.constant 5.000000e-01 : f32
    %17 = vector.broadcast %cst_11 : f32 to vector<2x384xf32>
    %18 = arith.mulf %17, %16 : vector<2x384xf32>
    %19 = math.tanh %18 : vector<2x384xf32>
    %cst_12 = arith.constant 1.000000e+00 : f32
    %20 = vector.broadcast %cst_12 : f32 to vector<2x384xf32>
    %21 = arith.addf %19, %20 : vector<2x384xf32>
    %cst_13 = arith.constant 5.000000e-01 : f32
    %22 = vector.broadcast %cst_13 : f32 to vector<2x384xf32>
    %23 = arith.mulf %22, %21 : vector<2x384xf32>
    %24 = vector.extract_strided_slice %23 {offsets = [0, 0], sizes = [2, 128], strides = [1, 1]} : vector<2x384xf32> to vector<2x128xf32>
    %25 = vector.extract_strided_slice %23 {offsets = [0, 128], sizes = [2, 128], strides = [1, 1]} : vector<2x384xf32> to vector<2x128xf32>
    %26 = vector.extract_strided_slice %23 {offsets = [0, 256], sizes = [2, 128], strides = [1, 1]} : vector<2x384xf32> to vector<2x128xf32>
    %27 = vector.extract_strided_slice %15 {offsets = [0, 384], sizes = [2, 128], strides = [1, 1]} : vector<2x512xf32> to vector<2x128xf32>
    %28 = math.tanh %27 : vector<2x128xf32>
    %29 = arith.mulf %25, %10 : vector<2x128xf32>
    %30 = arith.mulf %24, %28 : vector<2x128xf32>
    %31 = arith.addf %29, %30 : vector<2x128xf32>
    %32 = math.tanh %31 : vector<2x128xf32>
    %33 = arith.mulf %26, %32 : vector<2x128xf32>
    %34 = tpu.concatenate %33, %10 in 1 : vector<2x128xf32>, vector<2x128xf32> -> vector<2x256xf32>
    %35 = arith.truncf %34 : vector<2x256xf32> to vector<2x256xbf16>
    %c0_14 = arith.constant 0 : index
    %c0_15 = arith.constant 0 : index
    %36 = vector.load %arg4[%c0_14, %c0_15] : memref<256x512xbf16, #tpu.memory_space<vmem>>, vector<256x512xbf16>
    %cst_16 = arith.constant dense<0.000000e+00> : vector<2x512xf32>
    %37 = tpu.matmul %35, %36, %cst_16 {dimension_numbers = #tpu.dot_dimension_numbers<[1], [0], [0], [1], [0, 0, 1, 1], [], []>} : vector<2x256xbf16>, vector<256x512xbf16>, vector<2x512xf32> -> vector<2x512xf32>
    %38 = arith.addf %37, %9 : vector<2x512xf32>
    %39 = vector.extract_strided_slice %38 {offsets = [0, 0], sizes = [2, 384], strides = [1, 1]} : vector<2x512xf32> to vector<2x384xf32>
    %cst_17 = arith.constant 5.000000e-01 : f32
    %40 = vector.broadcast %cst_17 : f32 to vector<2x384xf32>
    %41 = arith.mulf %40, %39 : vector<2x384xf32>
    %42 = math.tanh %41 : vector<2x384xf32>
    %cst_18 = arith.constant 1.000000e+00 : f32
    %43 = vector.broadcast %cst_18 : f32 to vector<2x384xf32>
    %44 = arith.addf %42, %43 : vector<2x384xf32>
    %cst_19 = arith.constant 5.000000e-01 : f32
    %45 = vector.broadcast %cst_19 : f32 to vector<2x384xf32>
    %46 = arith.mulf %45, %44 : vector<2x384xf32>
    %47 = vector.extract_strided_slice %46 {offsets = [0, 0], sizes = [2, 128], strides = [1, 1]} : vector<2x384xf32> to vector<2x128xf32>
    %48 = vector.extract_strided_slice %46 {offsets = [0, 128], sizes = [2, 128], strides = [1, 1]} : vector<2x384xf32> to vector<2x128xf32>
    %49 = vector.extract_strided_slice %46 {offsets = [0, 256], sizes = [2, 128], strides = [1, 1]} : vector<2x384xf32> to vector<2x128xf32>
    %50 = vector.extract_strided_slice %38 {offsets = [0, 384], sizes = [2, 128], strides = [1, 1]} : vector<2x512xf32> to vector<2x128xf32>
    %51 = math.tanh %50 : vector<2x128xf32>
    %52 = arith.mulf %48, %10 : vector<2x128xf32>
    %53 = arith.mulf %47, %51 : vector<2x128xf32>
    %54 = arith.addf %52, %53 : vector<2x128xf32>
    %55 = math.tanh %54 : vector<2x128xf32>
    %56 = arith.mulf %49, %55 : vector<2x128xf32>
    %57 = arith.truncf %33 : vector<2x128xf32> to vector<2x128xbf16>
    %c0_20 = arith.constant 0 : index
    %c0_21 = arith.constant 0 : index
    %58 = vector.load %arg3[%c0_20, %c0_21] : memref<128x512xbf16, #tpu.memory_space<vmem>>, vector<128x512xbf16>
    %cst_22 = arith.constant dense<0.000000e+00> : vector<2x512xf32>
    %59 = tpu.matmul %57, %58, %cst_22 {dimension_numbers = #tpu.dot_dimension_numbers<[1], [0], [0], [1], [0, 0, 1, 1], [], []>} : vector<2x128xbf16>, vector<128x512xbf16>, vector<2x512xf32> -> vector<2x512xf32>
    %60 = vector.extract_strided_slice %6 {offsets = [2, 0], sizes = [2, 512], strides = [1, 1]} : vector<16x512xf32> to vector<2x512xf32>
    %61 = arith.addf %59, %60 : vector<2x512xf32>
    %62 = vector.extract_strided_slice %61 {offsets = [0, 0], sizes = [2, 384], strides = [1, 1]} : vector<2x512xf32> to vector<2x384xf32>
    %cst_23 = arith.constant 5.000000e-01 : f32
    %63 = vector.broadcast %cst_23 : f32 to vector<2x384xf32>
    %64 = arith.mulf %63, %62 : vector<2x384xf32>
    %65 = math.tanh %64 : vector<2x384xf32>
    %cst_24 = arith.constant 1.000000e+00 : f32
    %66 = vector.broadcast %cst_24 : f32 to vector<2x384xf32>
    %67 = arith.addf %65, %66 : vector<2x384xf32>
    %cst_25 = arith.constant 5.000000e-01 : f32
    %68 = vector.broadcast %cst_25 : f32 to vector<2x384xf32>
    %69 = arith.mulf %68, %67 : vector<2x384xf32>
    %70 = vector.extract_strided_slice %69 {offsets = [0, 0], sizes = [2, 128], strides = [1, 1]} : vector<2x384xf32> to vector<2x128xf32>
    %71 = vector.extract_strided_slice %69 {offsets = [0, 128], sizes = [2, 128], strides = [1, 1]} : vector<2x384xf32> to vector<2x128xf32>
    %72 = vector.extract_strided_slice %69 {offsets = [0, 256], sizes = [2, 128], strides = [1, 1]} : vector<2x384xf32> to vector<2x128xf32>
    %73 = vector.extract_strided_slice %61 {offsets = [0, 384], sizes = [2, 128], strides = [1, 1]} : vector<2x512xf32> to vector<2x128xf32>
    %74 = math.tanh %73 : vector<2x128xf32>
    %75 = arith.mulf %71, %31 : vector<2x128xf32>
    %76 = arith.mulf %70, %74 : vector<2x128xf32>
    %77 = arith.addf %75, %76 : vector<2x128xf32>
    %78 = math.tanh %77 : vector<2x128xf32>
    %79 = arith.mulf %72, %78 : vector<2x128xf32>
    %80 = tpu.concatenate %79, %56 in 1 : vector<2x128xf32>, vector<2x128xf32> -> vector<2x256xf32>
    %81 = arith.truncf %80 : vector<2x256xf32> to vector<2x256xbf16>
    %c0_26 = arith.constant 0 : index
    %c0_27 = arith.constant 0 : index
    %82 = vector.load %arg4[%c0_26, %c0_27] : memref<256x512xbf16, #tpu.memory_space<vmem>>, vector<256x512xbf16>
    %cst_28 = arith.constant dense<0.000000e+00> : vector<2x512xf32>
    %83 = tpu.matmul %81, %82, %cst_28 {dimension_numbers = #tpu.dot_dimension_numbers<[1], [0], [0], [1], [0, 0, 1, 1], [], []>} : vector<2x256xbf16>, vector<256x512xbf16>, vector<2x512xf32> -> vector<2x512xf32>
    %84 = arith.addf %83, %9 : vector<2x512xf32>
    %85 = vector.extract_strided_slice %84 {offsets = [0, 0], sizes = [2, 384], strides = [1, 1]} : vector<2x512xf32> to vector<2x384xf32>
    %cst_29 = arith.constant 5.000000e-01 : f32
    %86 = vector.broadcast %cst_29 : f32 to vector<2x384xf32>
    %87 = arith.mulf %86, %85 : vector<2x384xf32>
    %88 = math.tanh %87 : vector<2x384xf32>
    %cst_30 = arith.constant 1.000000e+00 : f32
    %89 = vector.broadcast %cst_30 : f32 to vector<2x384xf32>
    %90 = arith.addf %88, %89 : vector<2x384xf32>
    %cst_31 = arith.constant 5.000000e-01 : f32
    %91 = vector.broadcast %cst_31 : f32 to vector<2x384xf32>
    %92 = arith.mulf %91, %90 : vector<2x384xf32>
    %93 = vector.extract_strided_slice %92 {offsets = [0, 0], sizes = [2, 128], strides = [1, 1]} : vector<2x384xf32> to vector<2x128xf32>
    %94 = vector.extract_strided_slice %92 {offsets = [0, 128], sizes = [2, 128], strides = [1, 1]} : vector<2x384xf32> to vector<2x128xf32>
    %95 = vector.extract_strided_slice %92 {offsets = [0, 256], sizes = [2, 128], strides = [1, 1]} : vector<2x384xf32> to vector<2x128xf32>
    %96 = vector.extract_strided_slice %84 {offsets = [0, 384], sizes = [2, 128], strides = [1, 1]} : vector<2x512xf32> to vector<2x128xf32>
    %97 = math.tanh %96 : vector<2x128xf32>
    %98 = arith.mulf %94, %54 : vector<2x128xf32>
    %99 = arith.mulf %93, %97 : vector<2x128xf32>
    %100 = arith.addf %98, %99 : vector<2x128xf32>
    %101 = math.tanh %100 : vector<2x128xf32>
    %102 = arith.mulf %95, %101 : vector<2x128xf32>
    %103 = arith.truncf %79 : vector<2x128xf32> to vector<2x128xbf16>
    %c0_32 = arith.constant 0 : index
    %c0_33 = arith.constant 0 : index
    %104 = vector.load %arg3[%c0_32, %c0_33] : memref<128x512xbf16, #tpu.memory_space<vmem>>, vector<128x512xbf16>
    %cst_34 = arith.constant dense<0.000000e+00> : vector<2x512xf32>
    %105 = tpu.matmul %103, %104, %cst_34 {dimension_numbers = #tpu.dot_dimension_numbers<[1], [0], [0], [1], [0, 0, 1, 1], [], []>} : vector<2x128xbf16>, vector<128x512xbf16>, vector<2x512xf32> -> vector<2x512xf32>
    %106 = vector.extract_strided_slice %6 {offsets = [4, 0], sizes = [2, 512], strides = [1, 1]} : vector<16x512xf32> to vector<2x512xf32>
    %107 = arith.addf %105, %106 : vector<2x512xf32>
    %108 = vector.extract_strided_slice %107 {offsets = [0, 0], sizes = [2, 384], strides = [1, 1]} : vector<2x512xf32> to vector<2x384xf32>
    %cst_35 = arith.constant 5.000000e-01 : f32
    %109 = vector.broadcast %cst_35 : f32 to vector<2x384xf32>
    %110 = arith.mulf %109, %108 : vector<2x384xf32>
    %111 = math.tanh %110 : vector<2x384xf32>
    %cst_36 = arith.constant 1.000000e+00 : f32
    %112 = vector.broadcast %cst_36 : f32 to vector<2x384xf32>
    %113 = arith.addf %111, %112 : vector<2x384xf32>
    %cst_37 = arith.constant 5.000000e-01 : f32
    %114 = vector.broadcast %cst_37 : f32 to vector<2x384xf32>
    %115 = arith.mulf %114, %113 : vector<2x384xf32>
    %116 = vector.extract_strided_slice %115 {offsets = [0, 0], sizes = [2, 128], strides = [1, 1]} : vector<2x384xf32> to vector<2x128xf32>
    %117 = vector.extract_strided_slice %115 {offsets = [0, 128], sizes = [2, 128], strides = [1, 1]} : vector<2x384xf32> to vector<2x128xf32>
    %118 = vector.extract_strided_slice %115 {offsets = [0, 256], sizes = [2, 128], strides = [1, 1]} : vector<2x384xf32> to vector<2x128xf32>
    %119 = vector.extract_strided_slice %107 {offsets = [0, 384], sizes = [2, 128], strides = [1, 1]} : vector<2x512xf32> to vector<2x128xf32>
    %120 = math.tanh %119 : vector<2x128xf32>
    %121 = arith.mulf %117, %77 : vector<2x128xf32>
    %122 = arith.mulf %116, %120 : vector<2x128xf32>
    %123 = arith.addf %121, %122 : vector<2x128xf32>
    %124 = math.tanh %123 : vector<2x128xf32>
    %125 = arith.mulf %118, %124 : vector<2x128xf32>
    %126 = tpu.concatenate %125, %102 in 1 : vector<2x128xf32>, vector<2x128xf32> -> vector<2x256xf32>
    %127 = arith.truncf %126 : vector<2x256xf32> to vector<2x256xbf16>
    %c0_38 = arith.constant 0 : index
    %c0_39 = arith.constant 0 : index
    %128 = vector.load %arg4[%c0_38, %c0_39] : memref<256x512xbf16, #tpu.memory_space<vmem>>, vector<256x512xbf16>
    %cst_40 = arith.constant dense<0.000000e+00> : vector<2x512xf32>
    %129 = tpu.matmul %127, %128, %cst_40 {dimension_numbers = #tpu.dot_dimension_numbers<[1], [0], [0], [1], [0, 0, 1, 1], [], []>} : vector<2x256xbf16>, vector<256x512xbf16>, vector<2x512xf32> -> vector<2x512xf32>
    %130 = arith.addf %129, %9 : vector<2x512xf32>
    %131 = vector.extract_strided_slice %130 {offsets = [0, 0], sizes = [2, 384], strides = [1, 1]} : vector<2x512xf32> to vector<2x384xf32>
    %cst_41 = arith.constant 5.000000e-01 : f32
    %132 = vector.broadcast %cst_41 : f32 to vector<2x384xf32>
    %133 = arith.mulf %132, %131 : vector<2x384xf32>
    %134 = math.tanh %133 : vector<2x384xf32>
    %cst_42 = arith.constant 1.000000e+00 : f32
    %135 = vector.broadcast %cst_42 : f32 to vector<2x384xf32>
    %136 = arith.addf %134, %135 : vector<2x384xf32>
    %cst_43 = arith.constant 5.000000e-01 : f32
    %137 = vector.broadcast %cst_43 : f32 to vector<2x384xf32>
    %138 = arith.mulf %137, %136 : vector<2x384xf32>
    %139 = vector.extract_strided_slice %138 {offsets = [0, 0], sizes = [2, 128], strides = [1, 1]} : vector<2x384xf32> to vector<2x128xf32>
    %140 = vector.extract_strided_slice %138 {offsets = [0, 128], sizes = [2, 128], strides = [1, 1]} : vector<2x384xf32> to vector<2x128xf32>
    %141 = vector.extract_strided_slice %138 {offsets = [0, 256], sizes = [2, 128], strides = [1, 1]} : vector<2x384xf32> to vector<2x128xf32>
    %142 = vector.extract_strided_slice %130 {offsets = [0, 384], sizes = [2, 128], strides = [1, 1]} : vector<2x512xf32> to vector<2x128xf32>
    %143 = math.tanh %142 : vector<2x128xf32>
    %144 = arith.mulf %140, %100 : vector<2x128xf32>
    %145 = arith.mulf %139, %143 : vector<2x128xf32>
    %146 = arith.addf %144, %145 : vector<2x128xf32>
    %147 = math.tanh %146 : vector<2x128xf32>
    %148 = arith.mulf %141, %147 : vector<2x128xf32>
    %149 = arith.truncf %125 : vector<2x128xf32> to vector<2x128xbf16>
    %c0_44 = arith.constant 0 : index
    %c0_45 = arith.constant 0 : index
    %150 = vector.load %arg3[%c0_44, %c0_45] : memref<128x512xbf16, #tpu.memory_space<vmem>>, vector<128x512xbf16>
    %cst_46 = arith.constant dense<0.000000e+00> : vector<2x512xf32>
    %151 = tpu.matmul %149, %150, %cst_46 {dimension_numbers = #tpu.dot_dimension_numbers<[1], [0], [0], [1], [0, 0, 1, 1], [], []>} : vector<2x128xbf16>, vector<128x512xbf16>, vector<2x512xf32> -> vector<2x512xf32>
    %152 = vector.extract_strided_slice %6 {offsets = [6, 0], sizes = [2, 512], strides = [1, 1]} : vector<16x512xf32> to vector<2x512xf32>
    %153 = arith.addf %151, %152 : vector<2x512xf32>
    %154 = vector.extract_strided_slice %153 {offsets = [0, 0], sizes = [2, 384], strides = [1, 1]} : vector<2x512xf32> to vector<2x384xf32>
    %cst_47 = arith.constant 5.000000e-01 : f32
    %155 = vector.broadcast %cst_47 : f32 to vector<2x384xf32>
    %156 = arith.mulf %155, %154 : vector<2x384xf32>
    %157 = math.tanh %156 : vector<2x384xf32>
    %cst_48 = arith.constant 1.000000e+00 : f32
    %158 = vector.broadcast %cst_48 : f32 to vector<2x384xf32>
    %159 = arith.addf %157, %158 : vector<2x384xf32>
    %cst_49 = arith.constant 5.000000e-01 : f32
    %160 = vector.broadcast %cst_49 : f32 to vector<2x384xf32>
    %161 = arith.mulf %160, %159 : vector<2x384xf32>
    %162 = vector.extract_strided_slice %161 {offsets = [0, 0], sizes = [2, 128], strides = [1, 1]} : vector<2x384xf32> to vector<2x128xf32>
    %163 = vector.extract_strided_slice %161 {offsets = [0, 128], sizes = [2, 128], strides = [1, 1]} : vector<2x384xf32> to vector<2x128xf32>
    %164 = vector.extract_strided_slice %161 {offsets = [0, 256], sizes = [2, 128], strides = [1, 1]} : vector<2x384xf32> to vector<2x128xf32>
    %165 = vector.extract_strided_slice %153 {offsets = [0, 384], sizes = [2, 128], strides = [1, 1]} : vector<2x512xf32> to vector<2x128xf32>
    %166 = math.tanh %165 : vector<2x128xf32>
    %167 = arith.mulf %163, %123 : vector<2x128xf32>
    %168 = arith.mulf %162, %166 : vector<2x128xf32>
    %169 = arith.addf %167, %168 : vector<2x128xf32>
    %170 = math.tanh %169 : vector<2x128xf32>
    %171 = arith.mulf %164, %170 : vector<2x128xf32>
    %172 = tpu.concatenate %171, %148 in 1 : vector<2x128xf32>, vector<2x128xf32> -> vector<2x256xf32>
    %173 = arith.truncf %172 : vector<2x256xf32> to vector<2x256xbf16>
    %c0_50 = arith.constant 0 : index
    %c0_51 = arith.constant 0 : index
    %174 = vector.load %arg4[%c0_50, %c0_51] : memref<256x512xbf16, #tpu.memory_space<vmem>>, vector<256x512xbf16>
    %cst_52 = arith.constant dense<0.000000e+00> : vector<2x512xf32>
    %175 = tpu.matmul %173, %174, %cst_52 {dimension_numbers = #tpu.dot_dimension_numbers<[1], [0], [0], [1], [0, 0, 1, 1], [], []>} : vector<2x256xbf16>, vector<256x512xbf16>, vector<2x512xf32> -> vector<2x512xf32>
    %176 = arith.addf %175, %9 : vector<2x512xf32>
    %177 = vector.extract_strided_slice %176 {offsets = [0, 0], sizes = [2, 384], strides = [1, 1]} : vector<2x512xf32> to vector<2x384xf32>
    %cst_53 = arith.constant 5.000000e-01 : f32
    %178 = vector.broadcast %cst_53 : f32 to vector<2x384xf32>
    %179 = arith.mulf %178, %177 : vector<2x384xf32>
    %180 = math.tanh %179 : vector<2x384xf32>
    %cst_54 = arith.constant 1.000000e+00 : f32
    %181 = vector.broadcast %cst_54 : f32 to vector<2x384xf32>
    %182 = arith.addf %180, %181 : vector<2x384xf32>
    %cst_55 = arith.constant 5.000000e-01 : f32
    %183 = vector.broadcast %cst_55 : f32 to vector<2x384xf32>
    %184 = arith.mulf %183, %182 : vector<2x384xf32>
    %185 = vector.extract_strided_slice %184 {offsets = [0, 0], sizes = [2, 128], strides = [1, 1]} : vector<2x384xf32> to vector<2x128xf32>
    %186 = vector.extract_strided_slice %184 {offsets = [0, 128], sizes = [2, 128], strides = [1, 1]} : vector<2x384xf32> to vector<2x128xf32>
    %187 = vector.extract_strided_slice %184 {offsets = [0, 256], sizes = [2, 128], strides = [1, 1]} : vector<2x384xf32> to vector<2x128xf32>
    %188 = vector.extract_strided_slice %176 {offsets = [0, 384], sizes = [2, 128], strides = [1, 1]} : vector<2x512xf32> to vector<2x128xf32>
    %189 = math.tanh %188 : vector<2x128xf32>
    %190 = arith.mulf %186, %146 : vector<2x128xf32>
    %191 = arith.mulf %185, %189 : vector<2x128xf32>
    %192 = arith.addf %190, %191 : vector<2x128xf32>
    %193 = math.tanh %192 : vector<2x128xf32>
    %194 = arith.mulf %187, %193 : vector<2x128xf32>
    %195 = arith.truncf %171 : vector<2x128xf32> to vector<2x128xbf16>
    %c0_56 = arith.constant 0 : index
    %c0_57 = arith.constant 0 : index
    %196 = vector.load %arg3[%c0_56, %c0_57] : memref<128x512xbf16, #tpu.memory_space<vmem>>, vector<128x512xbf16>
    %cst_58 = arith.constant dense<0.000000e+00> : vector<2x512xf32>
    %197 = tpu.matmul %195, %196, %cst_58 {dimension_numbers = #tpu.dot_dimension_numbers<[1], [0], [0], [1], [0, 0, 1, 1], [], []>} : vector<2x128xbf16>, vector<128x512xbf16>, vector<2x512xf32> -> vector<2x512xf32>
    %198 = vector.extract_strided_slice %6 {offsets = [8, 0], sizes = [2, 512], strides = [1, 1]} : vector<16x512xf32> to vector<2x512xf32>
    %199 = arith.addf %197, %198 : vector<2x512xf32>
    %200 = vector.extract_strided_slice %199 {offsets = [0, 0], sizes = [2, 384], strides = [1, 1]} : vector<2x512xf32> to vector<2x384xf32>
    %cst_59 = arith.constant 5.000000e-01 : f32
    %201 = vector.broadcast %cst_59 : f32 to vector<2x384xf32>
    %202 = arith.mulf %201, %200 : vector<2x384xf32>
    %203 = math.tanh %202 : vector<2x384xf32>
    %cst_60 = arith.constant 1.000000e+00 : f32
    %204 = vector.broadcast %cst_60 : f32 to vector<2x384xf32>
    %205 = arith.addf %203, %204 : vector<2x384xf32>
    %cst_61 = arith.constant 5.000000e-01 : f32
    %206 = vector.broadcast %cst_61 : f32 to vector<2x384xf32>
    %207 = arith.mulf %206, %205 : vector<2x384xf32>
    %208 = vector.extract_strided_slice %207 {offsets = [0, 0], sizes = [2, 128], strides = [1, 1]} : vector<2x384xf32> to vector<2x128xf32>
    %209 = vector.extract_strided_slice %207 {offsets = [0, 128], sizes = [2, 128], strides = [1, 1]} : vector<2x384xf32> to vector<2x128xf32>
    %210 = vector.extract_strided_slice %207 {offsets = [0, 256], sizes = [2, 128], strides = [1, 1]} : vector<2x384xf32> to vector<2x128xf32>
    %211 = vector.extract_strided_slice %199 {offsets = [0, 384], sizes = [2, 128], strides = [1, 1]} : vector<2x512xf32> to vector<2x128xf32>
    %212 = math.tanh %211 : vector<2x128xf32>
    %213 = arith.mulf %209, %169 : vector<2x128xf32>
    %214 = arith.mulf %208, %212 : vector<2x128xf32>
    %215 = arith.addf %213, %214 : vector<2x128xf32>
    %216 = math.tanh %215 : vector<2x128xf32>
    %217 = arith.mulf %210, %216 : vector<2x128xf32>
    %218 = tpu.concatenate %217, %194 in 1 : vector<2x128xf32>, vector<2x128xf32> -> vector<2x256xf32>
    %219 = arith.truncf %218 : vector<2x256xf32> to vector<2x256xbf16>
    %c0_62 = arith.constant 0 : index
    %c0_63 = arith.constant 0 : index
    %220 = vector.load %arg4[%c0_62, %c0_63] : memref<256x512xbf16, #tpu.memory_space<vmem>>, vector<256x512xbf16>
    %cst_64 = arith.constant dense<0.000000e+00> : vector<2x512xf32>
    %221 = tpu.matmul %219, %220, %cst_64 {dimension_numbers = #tpu.dot_dimension_numbers<[1], [0], [0], [1], [0, 0, 1, 1], [], []>} : vector<2x256xbf16>, vector<256x512xbf16>, vector<2x512xf32> -> vector<2x512xf32>
    %222 = arith.addf %221, %9 : vector<2x512xf32>
    %223 = vector.extract_strided_slice %222 {offsets = [0, 0], sizes = [2, 384], strides = [1, 1]} : vector<2x512xf32> to vector<2x384xf32>
    %cst_65 = arith.constant 5.000000e-01 : f32
    %224 = vector.broadcast %cst_65 : f32 to vector<2x384xf32>
    %225 = arith.mulf %224, %223 : vector<2x384xf32>
    %226 = math.tanh %225 : vector<2x384xf32>
    %cst_66 = arith.constant 1.000000e+00 : f32
    %227 = vector.broadcast %cst_66 : f32 to vector<2x384xf32>
    %228 = arith.addf %226, %227 : vector<2x384xf32>
    %cst_67 = arith.constant 5.000000e-01 : f32
    %229 = vector.broadcast %cst_67 : f32 to vector<2x384xf32>
    %230 = arith.mulf %229, %228 : vector<2x384xf32>
    %231 = vector.extract_strided_slice %230 {offsets = [0, 0], sizes = [2, 128], strides = [1, 1]} : vector<2x384xf32> to vector<2x128xf32>
    %232 = vector.extract_strided_slice %230 {offsets = [0, 128], sizes = [2, 128], strides = [1, 1]} : vector<2x384xf32> to vector<2x128xf32>
    %233 = vector.extract_strided_slice %230 {offsets = [0, 256], sizes = [2, 128], strides = [1, 1]} : vector<2x384xf32> to vector<2x128xf32>
    %234 = vector.extract_strided_slice %222 {offsets = [0, 384], sizes = [2, 128], strides = [1, 1]} : vector<2x512xf32> to vector<2x128xf32>
    %235 = math.tanh %234 : vector<2x128xf32>
    %236 = arith.mulf %232, %192 : vector<2x128xf32>
    %237 = arith.mulf %231, %235 : vector<2x128xf32>
    %238 = arith.addf %236, %237 : vector<2x128xf32>
    %239 = math.tanh %238 : vector<2x128xf32>
    %240 = arith.mulf %233, %239 : vector<2x128xf32>
    %241 = arith.truncf %217 : vector<2x128xf32> to vector<2x128xbf16>
    %c0_68 = arith.constant 0 : index
    %c0_69 = arith.constant 0 : index
    %242 = vector.load %arg3[%c0_68, %c0_69] : memref<128x512xbf16, #tpu.memory_space<vmem>>, vector<128x512xbf16>
    %cst_70 = arith.constant dense<0.000000e+00> : vector<2x512xf32>
    %243 = tpu.matmul %241, %242, %cst_70 {dimension_numbers = #tpu.dot_dimension_numbers<[1], [0], [0], [1], [0, 0, 1, 1], [], []>} : vector<2x128xbf16>, vector<128x512xbf16>, vector<2x512xf32> -> vector<2x512xf32>
    %244 = vector.extract_strided_slice %6 {offsets = [10, 0], sizes = [2, 512], strides = [1, 1]} : vector<16x512xf32> to vector<2x512xf32>
    %245 = arith.addf %243, %244 : vector<2x512xf32>
    %246 = vector.extract_strided_slice %245 {offsets = [0, 0], sizes = [2, 384], strides = [1, 1]} : vector<2x512xf32> to vector<2x384xf32>
    %cst_71 = arith.constant 5.000000e-01 : f32
    %247 = vector.broadcast %cst_71 : f32 to vector<2x384xf32>
    %248 = arith.mulf %247, %246 : vector<2x384xf32>
    %249 = math.tanh %248 : vector<2x384xf32>
    %cst_72 = arith.constant 1.000000e+00 : f32
    %250 = vector.broadcast %cst_72 : f32 to vector<2x384xf32>
    %251 = arith.addf %249, %250 : vector<2x384xf32>
    %cst_73 = arith.constant 5.000000e-01 : f32
    %252 = vector.broadcast %cst_73 : f32 to vector<2x384xf32>
    %253 = arith.mulf %252, %251 : vector<2x384xf32>
    %254 = vector.extract_strided_slice %253 {offsets = [0, 0], sizes = [2, 128], strides = [1, 1]} : vector<2x384xf32> to vector<2x128xf32>
    %255 = vector.extract_strided_slice %253 {offsets = [0, 128], sizes = [2, 128], strides = [1, 1]} : vector<2x384xf32> to vector<2x128xf32>
    %256 = vector.extract_strided_slice %253 {offsets = [0, 256], sizes = [2, 128], strides = [1, 1]} : vector<2x384xf32> to vector<2x128xf32>
    %257 = vector.extract_strided_slice %245 {offsets = [0, 384], sizes = [2, 128], strides = [1, 1]} : vector<2x512xf32> to vector<2x128xf32>
    %258 = math.tanh %257 : vector<2x128xf32>
    %259 = arith.mulf %255, %215 : vector<2x128xf32>
    %260 = arith.mulf %254, %258 : vector<2x128xf32>
    %261 = arith.addf %259, %260 : vector<2x128xf32>
    %262 = math.tanh %261 : vector<2x128xf32>
    %263 = arith.mulf %256, %262 : vector<2x128xf32>
    %264 = tpu.concatenate %263, %240 in 1 : vector<2x128xf32>, vector<2x128xf32> -> vector<2x256xf32>
    %265 = arith.truncf %264 : vector<2x256xf32> to vector<2x256xbf16>
    %c0_74 = arith.constant 0 : index
    %c0_75 = arith.constant 0 : index
    %266 = vector.load %arg4[%c0_74, %c0_75] : memref<256x512xbf16, #tpu.memory_space<vmem>>, vector<256x512xbf16>
    %cst_76 = arith.constant dense<0.000000e+00> : vector<2x512xf32>
    %267 = tpu.matmul %265, %266, %cst_76 {dimension_numbers = #tpu.dot_dimension_numbers<[1], [0], [0], [1], [0, 0, 1, 1], [], []>} : vector<2x256xbf16>, vector<256x512xbf16>, vector<2x512xf32> -> vector<2x512xf32>
    %268 = arith.addf %267, %9 : vector<2x512xf32>
    %269 = vector.extract_strided_slice %268 {offsets = [0, 0], sizes = [2, 384], strides = [1, 1]} : vector<2x512xf32> to vector<2x384xf32>
    %cst_77 = arith.constant 5.000000e-01 : f32
    %270 = vector.broadcast %cst_77 : f32 to vector<2x384xf32>
    %271 = arith.mulf %270, %269 : vector<2x384xf32>
    %272 = math.tanh %271 : vector<2x384xf32>
    %cst_78 = arith.constant 1.000000e+00 : f32
    %273 = vector.broadcast %cst_78 : f32 to vector<2x384xf32>
    %274 = arith.addf %272, %273 : vector<2x384xf32>
    %cst_79 = arith.constant 5.000000e-01 : f32
    %275 = vector.broadcast %cst_79 : f32 to vector<2x384xf32>
    %276 = arith.mulf %275, %274 : vector<2x384xf32>
    %277 = vector.extract_strided_slice %276 {offsets = [0, 0], sizes = [2, 128], strides = [1, 1]} : vector<2x384xf32> to vector<2x128xf32>
    %278 = vector.extract_strided_slice %276 {offsets = [0, 128], sizes = [2, 128], strides = [1, 1]} : vector<2x384xf32> to vector<2x128xf32>
    %279 = vector.extract_strided_slice %276 {offsets = [0, 256], sizes = [2, 128], strides = [1, 1]} : vector<2x384xf32> to vector<2x128xf32>
    %280 = vector.extract_strided_slice %268 {offsets = [0, 384], sizes = [2, 128], strides = [1, 1]} : vector<2x512xf32> to vector<2x128xf32>
    %281 = math.tanh %280 : vector<2x128xf32>
    %282 = arith.mulf %278, %238 : vector<2x128xf32>
    %283 = arith.mulf %277, %281 : vector<2x128xf32>
    %284 = arith.addf %282, %283 : vector<2x128xf32>
    %285 = math.tanh %284 : vector<2x128xf32>
    %286 = arith.mulf %279, %285 : vector<2x128xf32>
    %287 = arith.truncf %263 : vector<2x128xf32> to vector<2x128xbf16>
    %c0_80 = arith.constant 0 : index
    %c0_81 = arith.constant 0 : index
    %288 = vector.load %arg3[%c0_80, %c0_81] : memref<128x512xbf16, #tpu.memory_space<vmem>>, vector<128x512xbf16>
    %cst_82 = arith.constant dense<0.000000e+00> : vector<2x512xf32>
    %289 = tpu.matmul %287, %288, %cst_82 {dimension_numbers = #tpu.dot_dimension_numbers<[1], [0], [0], [1], [0, 0, 1, 1], [], []>} : vector<2x128xbf16>, vector<128x512xbf16>, vector<2x512xf32> -> vector<2x512xf32>
    %290 = vector.extract_strided_slice %6 {offsets = [12, 0], sizes = [2, 512], strides = [1, 1]} : vector<16x512xf32> to vector<2x512xf32>
    %291 = arith.addf %289, %290 : vector<2x512xf32>
    %292 = vector.extract_strided_slice %291 {offsets = [0, 0], sizes = [2, 384], strides = [1, 1]} : vector<2x512xf32> to vector<2x384xf32>
    %cst_83 = arith.constant 5.000000e-01 : f32
    %293 = vector.broadcast %cst_83 : f32 to vector<2x384xf32>
    %294 = arith.mulf %293, %292 : vector<2x384xf32>
    %295 = math.tanh %294 : vector<2x384xf32>
    %cst_84 = arith.constant 1.000000e+00 : f32
    %296 = vector.broadcast %cst_84 : f32 to vector<2x384xf32>
    %297 = arith.addf %295, %296 : vector<2x384xf32>
    %cst_85 = arith.constant 5.000000e-01 : f32
    %298 = vector.broadcast %cst_85 : f32 to vector<2x384xf32>
    %299 = arith.mulf %298, %297 : vector<2x384xf32>
    %300 = vector.extract_strided_slice %299 {offsets = [0, 0], sizes = [2, 128], strides = [1, 1]} : vector<2x384xf32> to vector<2x128xf32>
    %301 = vector.extract_strided_slice %299 {offsets = [0, 128], sizes = [2, 128], strides = [1, 1]} : vector<2x384xf32> to vector<2x128xf32>
    %302 = vector.extract_strided_slice %299 {offsets = [0, 256], sizes = [2, 128], strides = [1, 1]} : vector<2x384xf32> to vector<2x128xf32>
    %303 = vector.extract_strided_slice %291 {offsets = [0, 384], sizes = [2, 128], strides = [1, 1]} : vector<2x512xf32> to vector<2x128xf32>
    %304 = math.tanh %303 : vector<2x128xf32>
    %305 = arith.mulf %301, %261 : vector<2x128xf32>
    %306 = arith.mulf %300, %304 : vector<2x128xf32>
    %307 = arith.addf %305, %306 : vector<2x128xf32>
    %308 = math.tanh %307 : vector<2x128xf32>
    %309 = arith.mulf %302, %308 : vector<2x128xf32>
    %310 = tpu.concatenate %309, %286 in 1 : vector<2x128xf32>, vector<2x128xf32> -> vector<2x256xf32>
    %311 = arith.truncf %310 : vector<2x256xf32> to vector<2x256xbf16>
    %c0_86 = arith.constant 0 : index
    %c0_87 = arith.constant 0 : index
    %312 = vector.load %arg4[%c0_86, %c0_87] : memref<256x512xbf16, #tpu.memory_space<vmem>>, vector<256x512xbf16>
    %cst_88 = arith.constant dense<0.000000e+00> : vector<2x512xf32>
    %313 = tpu.matmul %311, %312, %cst_88 {dimension_numbers = #tpu.dot_dimension_numbers<[1], [0], [0], [1], [0, 0, 1, 1], [], []>} : vector<2x256xbf16>, vector<256x512xbf16>, vector<2x512xf32> -> vector<2x512xf32>
    %314 = arith.addf %313, %9 : vector<2x512xf32>
    %315 = vector.extract_strided_slice %314 {offsets = [0, 0], sizes = [2, 384], strides = [1, 1]} : vector<2x512xf32> to vector<2x384xf32>
    %cst_89 = arith.constant 5.000000e-01 : f32
    %316 = vector.broadcast %cst_89 : f32 to vector<2x384xf32>
    %317 = arith.mulf %316, %315 : vector<2x384xf32>
    %318 = math.tanh %317 : vector<2x384xf32>
    %cst_90 = arith.constant 1.000000e+00 : f32
    %319 = vector.broadcast %cst_90 : f32 to vector<2x384xf32>
    %320 = arith.addf %318, %319 : vector<2x384xf32>
    %cst_91 = arith.constant 5.000000e-01 : f32
    %321 = vector.broadcast %cst_91 : f32 to vector<2x384xf32>
    %322 = arith.mulf %321, %320 : vector<2x384xf32>
    %323 = vector.extract_strided_slice %322 {offsets = [0, 0], sizes = [2, 128], strides = [1, 1]} : vector<2x384xf32> to vector<2x128xf32>
    %324 = vector.extract_strided_slice %322 {offsets = [0, 128], sizes = [2, 128], strides = [1, 1]} : vector<2x384xf32> to vector<2x128xf32>
    %325 = vector.extract_strided_slice %322 {offsets = [0, 256], sizes = [2, 128], strides = [1, 1]} : vector<2x384xf32> to vector<2x128xf32>
    %326 = vector.extract_strided_slice %314 {offsets = [0, 384], sizes = [2, 128], strides = [1, 1]} : vector<2x512xf32> to vector<2x128xf32>
    %327 = math.tanh %326 : vector<2x128xf32>
    %328 = arith.mulf %324, %284 : vector<2x128xf32>
    %329 = arith.mulf %323, %327 : vector<2x128xf32>
    %330 = arith.addf %328, %329 : vector<2x128xf32>
    %331 = math.tanh %330 : vector<2x128xf32>
    %332 = arith.mulf %325, %331 : vector<2x128xf32>
    %333 = arith.truncf %309 : vector<2x128xf32> to vector<2x128xbf16>
    %c0_92 = arith.constant 0 : index
    %c0_93 = arith.constant 0 : index
    %334 = vector.load %arg3[%c0_92, %c0_93] : memref<128x512xbf16, #tpu.memory_space<vmem>>, vector<128x512xbf16>
    %cst_94 = arith.constant dense<0.000000e+00> : vector<2x512xf32>
    %335 = tpu.matmul %333, %334, %cst_94 {dimension_numbers = #tpu.dot_dimension_numbers<[1], [0], [0], [1], [0, 0, 1, 1], [], []>} : vector<2x128xbf16>, vector<128x512xbf16>, vector<2x512xf32> -> vector<2x512xf32>
    %336 = vector.extract_strided_slice %6 {offsets = [14, 0], sizes = [2, 512], strides = [1, 1]} : vector<16x512xf32> to vector<2x512xf32>
    %337 = arith.addf %335, %336 : vector<2x512xf32>
    %338 = vector.extract_strided_slice %337 {offsets = [0, 0], sizes = [2, 384], strides = [1, 1]} : vector<2x512xf32> to vector<2x384xf32>
    %cst_95 = arith.constant 5.000000e-01 : f32
    %339 = vector.broadcast %cst_95 : f32 to vector<2x384xf32>
    %340 = arith.mulf %339, %338 : vector<2x384xf32>
    %341 = math.tanh %340 : vector<2x384xf32>
    %cst_96 = arith.constant 1.000000e+00 : f32
    %342 = vector.broadcast %cst_96 : f32 to vector<2x384xf32>
    %343 = arith.addf %341, %342 : vector<2x384xf32>
    %cst_97 = arith.constant 5.000000e-01 : f32
    %344 = vector.broadcast %cst_97 : f32 to vector<2x384xf32>
    %345 = arith.mulf %344, %343 : vector<2x384xf32>
    %346 = vector.extract_strided_slice %345 {offsets = [0, 0], sizes = [2, 128], strides = [1, 1]} : vector<2x384xf32> to vector<2x128xf32>
    %347 = vector.extract_strided_slice %345 {offsets = [0, 128], sizes = [2, 128], strides = [1, 1]} : vector<2x384xf32> to vector<2x128xf32>
    %348 = vector.extract_strided_slice %345 {offsets = [0, 256], sizes = [2, 128], strides = [1, 1]} : vector<2x384xf32> to vector<2x128xf32>
    %349 = vector.extract_strided_slice %337 {offsets = [0, 384], sizes = [2, 128], strides = [1, 1]} : vector<2x512xf32> to vector<2x128xf32>
    %350 = math.tanh %349 : vector<2x128xf32>
    %351 = arith.mulf %347, %307 : vector<2x128xf32>
    %352 = arith.mulf %346, %350 : vector<2x128xf32>
    %353 = arith.addf %351, %352 : vector<2x128xf32>
    %354 = math.tanh %353 : vector<2x128xf32>
    %355 = arith.mulf %348, %354 : vector<2x128xf32>
    %356 = tpu.concatenate %355, %332 in 1 : vector<2x128xf32>, vector<2x128xf32> -> vector<2x256xf32>
    %357 = arith.truncf %356 : vector<2x256xf32> to vector<2x256xbf16>
    %c0_98 = arith.constant 0 : index
    %c0_99 = arith.constant 0 : index
    %358 = vector.load %arg4[%c0_98, %c0_99] : memref<256x512xbf16, #tpu.memory_space<vmem>>, vector<256x512xbf16>
    %cst_100 = arith.constant dense<0.000000e+00> : vector<2x512xf32>
    %359 = tpu.matmul %357, %358, %cst_100 {dimension_numbers = #tpu.dot_dimension_numbers<[1], [0], [0], [1], [0, 0, 1, 1], [], []>} : vector<2x256xbf16>, vector<256x512xbf16>, vector<2x512xf32> -> vector<2x512xf32>
    %360 = arith.addf %359, %9 : vector<2x512xf32>
    %361 = vector.extract_strided_slice %360 {offsets = [0, 0], sizes = [2, 384], strides = [1, 1]} : vector<2x512xf32> to vector<2x384xf32>
    %cst_101 = arith.constant 5.000000e-01 : f32
    %362 = vector.broadcast %cst_101 : f32 to vector<2x384xf32>
    %363 = arith.mulf %362, %361 : vector<2x384xf32>
    %364 = math.tanh %363 : vector<2x384xf32>
    %cst_102 = arith.constant 1.000000e+00 : f32
    %365 = vector.broadcast %cst_102 : f32 to vector<2x384xf32>
    %366 = arith.addf %364, %365 : vector<2x384xf32>
    %cst_103 = arith.constant 5.000000e-01 : f32
    %367 = vector.broadcast %cst_103 : f32 to vector<2x384xf32>
    %368 = arith.mulf %367, %366 : vector<2x384xf32>
    %369 = vector.extract_strided_slice %368 {offsets = [0, 0], sizes = [2, 128], strides = [1, 1]} : vector<2x384xf32> to vector<2x128xf32>
    %370 = vector.extract_strided_slice %368 {offsets = [0, 128], sizes = [2, 128], strides = [1, 1]} : vector<2x384xf32> to vector<2x128xf32>
    %371 = vector.extract_strided_slice %368 {offsets = [0, 256], sizes = [2, 128], strides = [1, 1]} : vector<2x384xf32> to vector<2x128xf32>
    %372 = vector.extract_strided_slice %360 {offsets = [0, 384], sizes = [2, 128], strides = [1, 1]} : vector<2x512xf32> to vector<2x128xf32>
    %373 = math.tanh %372 : vector<2x128xf32>
    %374 = arith.mulf %370, %330 : vector<2x128xf32>
    %375 = arith.mulf %369, %373 : vector<2x128xf32>
    %376 = arith.addf %374, %375 : vector<2x128xf32>
    %377 = math.tanh %376 : vector<2x128xf32>
    %378 = arith.mulf %371, %377 : vector<2x128xf32>
    %c0_104 = arith.constant 0 : index
    %c0_105 = arith.constant 0 : index
    %379 = vector.load %arg6[%c0_104, %c0_105] : memref<1x128xf32, #tpu.memory_space<vmem>>, vector<1x128xf32>
    %380 = vector.broadcast %379 : vector<1x128xf32> to vector<2x128xf32>
    %381 = arith.mulf %378, %380 : vector<2x128xf32>
    %cst_106 = arith.constant dense<0.000000e+00> : vector<2xf32>
    %382 = vector.multi_reduction <add>, %381, %cst_106 [1] : vector<2x128xf32> to vector<2xf32>
    %383 = vector.shape_cast %382 : vector<2xf32> to vector<2x1xf32>
    %c0_107 = arith.constant 0 : index
    %c0_108 = arith.constant 0 : index
    %384 = vector.load %arg7[%c0_107, %c0_108] : memref<1x1xf32, #tpu.memory_space<vmem>>, vector<1x1xf32>
    %385 = vector.broadcast %384 : vector<1x1xf32> to vector<2x1xf32>
    %386 = arith.addf %383, %385 : vector<2x1xf32>
    %387 = arith.negf %386 : vector<2x1xf32>
    %388 = math.exp %387 : vector<2x1xf32>
    %cst_109 = arith.constant 1.000000e+00 : f32
    %389 = vector.broadcast %cst_109 : f32 to vector<2x1xf32>
    %390 = arith.addf %389, %388 : vector<2x1xf32>
    %391 = arith.divf %389, %390 : vector<2x1xf32>
    %c0_110 = arith.constant 0 : index
    %c0_111 = arith.constant 0 : index
    %392 = vector.load %arg8[%c0_110, %c0_111] : memref<2x1xf32, #tpu.memory_space<vmem>>, vector<2x1xf32>
    tpu.vector_store %arg8[%c0_110, %c0_111], %391 {strides = array<i32>} : memref<2x1xf32, #tpu.memory_space<vmem>>, vector<2x1xf32>,
    return
  }
}

</mosaic_0001>

<llo_original>
// kernel: lstm_model_forward.1
$region0: #{lstm_model_forward.1}
  #allocation0 [shape = 'u32[]', space=smem, size = 0x4, offset = 0x4, fixed_abs, tag = 'smem constant byte address 0x4 - core index']
  #allocation1 [shape = 'u32[72,128]{1,0:T(1,128)}', space=vmem, size = 0x9000, scoped, tag = 'internal scratch']
  #allocation2 [shape = 'f32[1,1]{1,0:T(1,128)S(1)}', space=vmem, size = 0x200, scoped, tag = 'scoped memory for lstm_model_forward.1']
  %s0 = inlined_call_operand.vmem [shape: f32[16,16], index: 0, kind: input, shape index: {}]
  %s1 = inlined_call_operand.vmem [shape: bf16[16,512], index: 1, kind: input, shape index: {}]
  %s2 = inlined_call_operand.vmem [shape: f32[1,512], index: 2, kind: input, shape index: {}]
  %s3 = inlined_call_operand.hbm [shape: bf16[128,512], index: 3, kind: input, shape index: {}]
  %s4 = inlined_call_operand.hbm [shape: bf16[256,512], index: 4, kind: input, shape index: {}]
  %s5 = inlined_call_operand.vmem [shape: f32[1,512], index: 5, kind: input, shape index: {}]
  %s6 = inlined_call_operand.vmem [shape: f32[1,128], index: 6, kind: input, shape index: {}]
  %s7 = inlined_call_operand.<no memory space> [shape: f32[1,1], index: 7, kind: input, shape index: {}]
  %s8 = inlined_call_operand.vmem [shape: f32[2,1], index: 8, kind: output, shape index: {}]
  %s9 = sld [smem:[#allocation0]]
  $region50: #{lstm_model_forward.1} parent=0
    _
  %s11 = ssub.s32 1, %s9
  %s12 = scalar_select 0, %s11, %s9
  %v13 = vstv %s7
  %14 = vst [vmem:[#allocation2] sm:$0x1] %v13
  $region1: #{lstm_model_forward.1} parent=0
    #allocation3 [shape = 'u8[131072]{0}', space=vmem, size = 0x20000, scoped, tag = 'input window, operand 3, single buffered']
    #allocation4 [shape = 's32[1]{0}', space=sflag, size = 0x4, scoped, tag = 'scoped memory for lstm_model_forward.1']
    #allocation5 [shape = 'u8[262144]{0}', space=vmem, size = 0x40000, scoped, tag = 'input window, operand 4, single buffered']
    #allocation6 [shape = 's32[1]{0}', space=sflag, size = 0x4, scoped, tag = 'scoped memory for lstm_model_forward.1']
    %15 = vsyncpa [#allocation4], 0
    %16 = vsyncpa [#allocation6], 0
    // Predicated region
    $region2: #{lstm_model_forward.1} parent=1 // pred_check
      _
    $region3: #{lstm_model_forward.1} parent=1 // pred_check_branch
      %18 = sbr.rel (0) target = $region5
    $region4: #{lstm_model_forward.1} parent=1 // pred_region
      _
    $region5: #{lstm_model_forward.1} parent=1 // pred_fallthru
      _
    // Predicated region
    $region6: #{lstm_model_forward.1} parent=1 // pred_check
      _
    $region7: #{lstm_model_forward.1} parent=1 // pred_check_branch
      %20 = sbr.rel (0) target = $region9
    $region8: #{lstm_model_forward.1} parent=1 // pred_region
      _
    $region9: #{lstm_model_forward.1} parent=1 // pred_fallthru
      _
    // Predicated region
    $region10: #{lstm_model_forward.1} parent=1 // pred_check
      _
    $region11: #{lstm_model_forward.1} parent=1 // pred_check_branch
      %22 = sbr.rel (0) target = $region13
    $region12: #{lstm_model_forward.1} parent=1 // pred_region
      _
    $region13: #{lstm_model_forward.1} parent=1 // pred_fallthru
      _
    // Predicated region
    $region14: #{lstm_model_forward.1} parent=1 // pred_check
      _
    $region15: #{lstm_model_forward.1} parent=1 // pred_check_branch
      %24 = sbr.rel (0) target = $region17
    $region16: #{lstm_model_forward.1} parent=1 // pred_region
      %26 = vsyncadd [#allocation4], 0
      %s27 = sshll.u32 %s3, 4
      %s28 = int_to_ptr.hbm [resolvable:$true] %s27
      %s29 = sshll.u32 [#allocation3], 4
      %s30 = int_to_ptr.vmem [resolvable:$true] %s29
      %35 = dma.hbm_to_vmem [thread:$0]  %s28, 4096, %s30, [#allocation4], 256, 256, 16
    $region17: #{lstm_model_forward.1} parent=1 // pred_fallthru
      _
    // Predicated region
    $region18: #{lstm_model_forward.1} parent=1 // pred_check
      _
    $region19: #{lstm_model_forward.1} parent=1 // pred_check_branch
      %37 = sbr.rel (0) target = $region21
    $region20: #{lstm_model_forward.1} parent=1 // pred_region
      %39 = vsyncadd [#allocation6], 0
      %s40 = sshll.u32 %s4, 4
      %s41 = int_to_ptr.hbm [resolvable:$true] %s40
      %s42 = sshll.u32 [#allocation5], 4
      %s43 = int_to_ptr.vmem [resolvable:$true] %s42
      %48 = dma.hbm_to_vmem [thread:$0]  %s41, 8192, %s43, [#allocation6], 256, 256, 16
    $region21: #{lstm_model_forward.1} parent=1 // pred_fallthru
      _
    // Predicated region
    $region22: #{lstm_model_forward.1} parent=1 // pred_check
      _
    $region23: #{lstm_model_forward.1} parent=1 // pred_check_branch
      %50 = sbr.rel (0) target = $region25
    $region24: #{lstm_model_forward.1} parent=1 // pred_region
      _
    $region25: #{lstm_model_forward.1} parent=1 // pred_fallthru
      _
    // Predicated region
    $region26: #{lstm_model_forward.1} parent=1 // pred_check
      _
    $region27: #{lstm_model_forward.1} parent=1 // pred_check_branch
      %52 = sbr.rel (0) target = $region29
    $region28: #{lstm_model_forward.1} parent=1 // pred_region
      _
    $region29: #{lstm_model_forward.1} parent=1 // pred_fallthru
      _
    // Predicated region
    $region30: #{lstm_model_forward.1} parent=1 // pred_check
      _
    $region31: #{lstm_model_forward.1} parent=1 // pred_check_branch
      %54 = sbr.rel (0) target = $region33
    $region32: #{lstm_model_forward.1} parent=1 // pred_region
      _
    $region33: #{lstm_model_forward.1} parent=1 // pred_fallthru
      _
    // Predicated region
    $region34: #{lstm_model_forward.1} parent=1 // pred_check
      _
    $region35: #{lstm_model_forward.1} parent=1 // pred_check_branch
      %56 = sbr.rel (0) target = $region37
    $region36: #{lstm_model_forward.1} parent=1 // pred_region
      %58 = dma.done [#allocation4], 4096
    $region37: #{lstm_model_forward.1} parent=1 // pred_fallthru
      _
    // Predicated region
    $region38: #{lstm_model_forward.1} parent=1 // pred_check
      _
    $region39: #{lstm_model_forward.1} parent=1 // pred_check_branch
      %60 = sbr.rel (0) target = $region41
    $region40: #{lstm_model_forward.1} parent=1 // pred_region
      %62 = dma.done [#allocation6], 8192
    $region41: #{lstm_model_forward.1} parent=1 // pred_fallthru
      _
    %v64 = vld [vmem:[%s0] sm:$0xff]
    %v65 = vld [vmem:[%s0 + $0x8] sm:$0xff]
    %v66 = vpack.c.bf16 %v65, %v64
    %v67 = vld [vmem:[%s1] sm:$0xff]
    %v68 = vld [vmem:[%s1 + $0x8] sm:$0xff]
    %v69 = vld [vmem:[%s1 + $0x10] sm:$0xff]
    %v70 = vld [vmem:[%s1 + $0x18] sm:$0xff]
    %v71 = vld [vmem:[%s2] sm:$0xf]
    %v73 = vperm.slane %v71, 0
    %v74 = vperm.slane %v71, 1
    %v75 = vperm.slane %v71, 2
    %v76 = vperm.slane %v71, 3
    %v85 = vunpack.c.l.b16 %v67
    %v86 = vunpack.c.h.b16 %v67
    %v87 = vunpack.c.l.b16 %v68
    %v88 = vunpack.c.h.b16 %v68
    %v89 = vunpack.c.l.b16 %v69
    %v90 = vunpack.c.h.b16 %v69
    %v91 = vunpack.c.l.b16 %v70
    %v92 = vunpack.c.h.b16 %v70
    %v93 = vpack.c.b16 %v89, %v85
    %v94 = vpack.c.b16 %v90, %v86
    %v95 = vpack.c.b16 %v91, %v87
    %v96 = vpack.c.b16 %v92, %v88
    %vm101 = vcmask 130048
    %v103 = vsel %vm101, %v66, 0
    %105 = vmatpush.bf16.msra.mxu0 0
    %106 = vmatpush.bf16.msra.mxu0 0
    %107 = vmatpush.bf16.msra.mxu0 0
    %108 = vmatpush.bf16.msra.mxu0 0
    %109 = vmatpush.bf16.msra.mxu0 0
    %110 = vmatpush.bf16.msra.mxu0 0
    %111 = vmatpush.bf16.msra.mxu0 0
    %112 = vmatpush.bf16.msra.mxu0 %v93
    %113 = vmatmul.bf16.gmra.mxu0 %v103
    %v114 = vpop.f32.mrf.mxu0
    %v115 = vadd.f32 %v73, %v114
    %v116 = vpop.f32.mrf.mxu0
    %v117 = vadd.f32 %v73, %v116
    %118 = vdwg.mxu0
    %119 = vmatpush.bf16.msra.mxu0 0
    %120 = vmatpush.bf16.msra.mxu0 0
    %121 = vmatpush.bf16.msra.mxu0 0
    %122 = vmatpush.bf16.msra.mxu0 0
    %123 = vmatpush.bf16.msra.mxu0 0
    %124 = vmatpush.bf16.msra.mxu0 0
    %125 = vmatpush.bf16.msra.mxu0 0
    %126 = vmatpush.bf16.msra.mxu0 %v94
    %127 = vmatmul.bf16.gmra.mxu0 %v103
    %v128 = vpop.f32.mrf.mxu0
    %v129 = vadd.f32 %v74, %v128
    %v130 = vpop.f32.mrf.mxu0
    %v131 = vadd.f32 %v74, %v130
    %132 = vdwg.mxu0
    %133 = vmatpush.bf16.msra.mxu0 0
    %134 = vmatpush.bf16.msra.mxu0 0
    %135 = vmatpush.bf16.msra.mxu0 0
    %136 = vmatpush.bf16.msra.mxu0 0
    %137 = vmatpush.bf16.msra.mxu0 0
    %138 = vmatpush.bf16.msra.mxu0 0
    %139 = vmatpush.bf16.msra.mxu0 0
    %140 = vmatpush.bf16.msra.mxu0 %v95
    %141 = vmatmul.bf16.gmra.mxu0 %v103
    %v142 = vpop.f32.mrf.mxu0
    %v143 = vadd.f32 %v75, %v142
    %v144 = vpop.f32.mrf.mxu0
    %v145 = vadd.f32 %v75, %v144
    %146 = vdwg.mxu0
    %147 = vmatpush.bf16.msra.mxu0 0
    %148 = vmatpush.bf16.msra.mxu0 0
    %149 = vmatpush.bf16.msra.mxu0 0
    %150 = vmatpush.bf16.msra.mxu0 0
    %151 = vmatpush.bf16.msra.mxu0 0
    %152 = vmatpush.bf16.msra.mxu0 0
    %153 = vmatpush.bf16.msra.mxu0 0
    %154 = vmatpush.bf16.msra.mxu0 %v96
    %155 = vmatmul.bf16.gmra.mxu0 %v103
    %v156 = vpop.f32.mrf.mxu0
    %v157 = vadd.f32 %v76, %v156
    %v158 = vpop.f32.mrf.mxu0
    %v159 = vadd.f32 %v76, %v158
    %160 = vdwg.mxu0
    %v161 = vld [vmem:[%s5] sm:$0xf]
    %v163 = vperm.slane %v161, 0
    %v164 = vperm.slane %v161, 1
    %v165 = vperm.slane %v161, 2
    %v166 = vperm.slane %v161, 3
    %v171 = vld [vmem:[#allocation3] sm:$0xff]
    %v172 = vld [vmem:[#allocation3 + $0x8] sm:$0xff]
    %v173 = vld [vmem:[#allocation3 + $0x10] sm:$0xff]
    %v174 = vld [vmem:[#allocation3 + $0x18] sm:$0xff]
    %v175 = vld [vmem:[#allocation3 + $0x20] sm:$0xff]
    %v176 = vld [vmem:[#allocation3 + $0x28] sm:$0xff]
    %v177 = vld [vmem:[#allocation3 + $0x30] sm:$0xff]
    %v178 = vld [vmem:[#allocation3 + $0x38] sm:$0xff]
    %v179 = vld [vmem:[#allocation3 + $0x40] sm:$0xff]
    %v180 = vld [vmem:[#allocation3 + $0x48] sm:$0xff]
    %v181 = vld [vmem:[#allocation3 + $0x50] sm:$0xff]
    %v182 = vld [vmem:[#allocation3 + $0x58] sm:$0xff]
    %v183 = vld [vmem:[#allocation3 + $0x60] sm:$0xff]
    %v184 = vld [vmem:[#allocation3 + $0x68] sm:$0xff]
    %v185 = vld [vmem:[#allocation3 + $0x70] sm:$0xff]
    %v186 = vld [vmem:[#allocation3 + $0x78] sm:$0xff]
    %v187 = vld [vmem:[#allocation3 + $0x80] sm:$0xff]
    %v188 = vld [vmem:[#allocation3 + $0x88] sm:$0xff]
    %v189 = vld [vmem:[#allocation3 + $0x90] sm:$0xff]
    %v190 = vld [vmem:[#allocation3 + $0x98] sm:$0xff]
    %v191 = vld [vmem:[#allocation3 + $0xa0] sm:$0xff]
    %v192 = vld [vmem:[#allocation3 + $0xa8] sm:$0xff]
    %v193 = vld [vmem:[#allocation3 + $0xb0] sm:$0xff]
    %v194 = vld [vmem:[#allocation3 + $0xb8] sm:$0xff]
    %v195 = vld [vmem:[#allocation3 + $0xc0] sm:$0xff]
    %v196 = vld [vmem:[#allocation3 + $0xc8] sm:$0xff]
    %v197 = vld [vmem:[#allocation3 + $0xd0] sm:$0xff]
    %v198 = vld [vmem:[#allocation3 + $0xd8] sm:$0xff]
    %v199 = vld [vmem:[#allocation3 + $0xe0] sm:$0xff]
    %v200 = vld [vmem:[#allocation3 + $0xe8] sm:$0xff]
    %v201 = vld [vmem:[#allocation3 + $0xf0] sm:$0xff]
    %v202 = vld [vmem:[#allocation3 + $0xf8] sm:$0xff]
    %v235 = vunpack.c.l.b16 %v171
    %v236 = vunpack.c.h.b16 %v171
    %v237 = vunpack.c.l.b16 %v172
    %v238 = vunpack.c.h.b16 %v172
    %v239 = vunpack.c.l.b16 %v173
    %v240 = vunpack.c.h.b16 %v173
    %v241 = vunpack.c.l.b16 %v174
    %v242 = vunpack.c.h.b16 %v174
    %v243 = vunpack.c.l.b16 %v175
    %v244 = vunpack.c.h.b16 %v175
    %v245 = vunpack.c.l.b16 %v176
    %v246 = vunpack.c.h.b16 %v176
    %v247 = vunpack.c.l.b16 %v177
    %v248 = vunpack.c.h.b16 %v177
    %v249 = vunpack.c.l.b16 %v178
    %v250 = vunpack.c.h.b16 %v178
    %v251 = vunpack.c.l.b16 %v179
    %v252 = vunpack.c.h.b16 %v179
    %v253 = vunpack.c.l.b16 %v180
    %v254 = vunpack.c.h.b16 %v180
    %v255 = vunpack.c.l.b16 %v181
    %v256 = vunpack.c.h.b16 %v181
    %v257 = vunpack.c.l.b16 %v182
    %v258 = vunpack.c.h.b16 %v182
    %v259 = vunpack.c.l.b16 %v183
    %v260 = vunpack.c.h.b16 %v183
    %v261 = vunpack.c.l.b16 %v184
    %v262 = vunpack.c.h.b16 %v184
    %v263 = vunpack.c.l.b16 %v185
    %v264 = vunpack.c.h.b16 %v185
    %v265 = vunpack.c.l.b16 %v186
    %v266 = vunpack.c.h.b16 %v186
    %v267 = vunpack.c.l.b16 %v187
    %v268 = vunpack.c.h.b16 %v187
    %v269 = vunpack.c.l.b16 %v188
    %v270 = vunpack.c.h.b16 %v188
    %v271 = vunpack.c.l.b16 %v189
    %v272 = vunpack.c.h.b16 %v189
    %v273 = vunpack.c.l.b16 %v190
    %v274 = vunpack.c.h.b16 %v190
    %v275 = vunpack.c.l.b16 %v191
    %v276 = vunpack.c.h.b16 %v191
    %v277 = vunpack.c.l.b16 %v192
    %v278 = vunpack.c.h.b16 %v192
    %v279 = vunpack.c.l.b16 %v193
    %v280 = vunpack.c.h.b16 %v193
    %v281 = vunpack.c.l.b16 %v194
    %v282 = vunpack.c.h.b16 %v194
    %v283 = vunpack.c.l.b16 %v195
    %v284 = vunpack.c.h.b16 %v195
    %v285 = vunpack.c.l.b16 %v196
    %v286 = vunpack.c.h.b16 %v196
    %v287 = vunpack.c.l.b16 %v197
    %v288 = vunpack.c.h.b16 %v197
    %v289 = vunpack.c.l.b16 %v198
    %v290 = vunpack.c.h.b16 %v198
    %v291 = vunpack.c.l.b16 %v199
    %v292 = vunpack.c.h.b16 %v199
    %v293 = vunpack.c.l.b16 %v200
    %v294 = vunpack.c.h.b16 %v200
    %v295 = vunpack.c.l.b16 %v201
    %v296 = vunpack.c.h.b16 %v201
    %v297 = vunpack.c.l.b16 %v202
    %v298 = vunpack.c.h.b16 %v202
    %v299 = vpack.c.b16 %v239, %v235
    %v300 = vpack.c.b16 %v240, %v236
    %v301 = vpack.c.b16 %v241, %v237
    %v302 = vpack.c.b16 %v242, %v238
    %v303 = vpack.c.b16 %v247, %v243
    %v304 = vpack.c.b16 %v248, %v244
    %v305 = vpack.c.b16 %v249, %v245
    %v306 = vpack.c.b16 %v250, %v246
    %v307 = vpack.c.b16 %v255, %v251
    %v308 = vpack.c.b16 %v256, %v252
    %v309 = vpack.c.b16 %v257, %v253
    %v310 = vpack.c.b16 %v258, %v254
    %v311 = vpack.c.b16 %v263, %v259
    %v312 = vpack.c.b16 %v264, %v260
    %v313 = vpack.c.b16 %v265, %v261
    %v314 = vpack.c.b16 %v266, %v262
    %v315 = vpack.c.b16 %v271, %v267
    %v316 = vpack.c.b16 %v272, %v268
    %v317 = vpack.c.b16 %v273, %v269
    %v318 = vpack.c.b16 %v274, %v270
    %v319 = vpack.c.b16 %v279, %v275
    %v320 = vpack.c.b16 %v280, %v276
    %v321 = vpack.c.b16 %v281, %v277
    %v322 = vpack.c.b16 %v282, %v278
    %v323 = vpack.c.b16 %v287, %v283
    %v324 = vpack.c.b16 %v288, %v284
    %v325 = vpack.c.b16 %v289, %v285
    %v326 = vpack.c.b16 %v290, %v286
    %v327 = vpack.c.b16 %v295, %v291
    %v328 = vpack.c.b16 %v296, %v292
    %v329 = vpack.c.b16 %v297, %v293
    %v330 = vpack.c.b16 %v298, %v294
    %363 = vmatpush.bf16.msra.mxu0 %v327
    %364 = vmatpush.bf16.msra.mxu0 %v323
    %365 = vmatpush.bf16.msra.mxu0 %v319
    %366 = vmatpush.bf16.msra.mxu0 %v315
    %367 = vmatpush.bf16.msra.mxu0 %v311
    %368 = vmatpush.bf16.msra.mxu0 %v307
    %369 = vmatpush.bf16.msra.mxu0 %v303
    %370 = vmatpush.bf16.msra.mxu0 %v299
    %371 = vmatmul.bf16.gmra.mxu0 0
    %v372 = vpop.f32.mrf.mxu0
    %v373 = vadd.f32 %v115, %v372
    %v374 = vpop.f32.mrf.mxu0
    %375 = vdwg.mxu0
    %376 = vmatpush.bf16.msra.mxu0 %v328
    %377 = vmatpush.bf16.msra.mxu0 %v324
    %378 = vmatpush.bf16.msra.mxu0 %v320
    %379 = vmatpush.bf16.msra.mxu0 %v316
    %380 = vmatpush.bf16.msra.mxu0 %v312
    %381 = vmatpush.bf16.msra.mxu0 %v308
    %382 = vmatpush.bf16.msra.mxu0 %v304
    %383 = vmatpush.bf16.msra.mxu0 %v300
    %384 = vmatmul.bf16.gmra.mxu0 0
    %v385 = vpop.f32.mrf.mxu0
    %v386 = vadd.f32 %v129, %v385
    %v387 = vpop.f32.mrf.mxu0
    %388 = vdwg.mxu0
    %389 = vmatpush.bf16.msra.mxu0 %v329
    %390 = vmatpush.bf16.msra.mxu0 %v325
    %391 = vmatpush.bf16.msra.mxu0 %v321
    %392 = vmatpush.bf16.msra.mxu0 %v317
    %393 = vmatpush.bf16.msra.mxu0 %v313
    %394 = vmatpush.bf16.msra.mxu0 %v309
    %395 = vmatpush.bf16.msra.mxu0 %v305
    %396 = vmatpush.bf16.msra.mxu0 %v301
    %397 = vmatmul.bf16.gmra.mxu0 0
    %v398 = vpop.f32.mrf.mxu0
    %v399 = vadd.f32 %v143, %v398
    %v400 = vpop.f32.mrf.mxu0
    %401 = vdwg.mxu0
    %402 = vmatpush.bf16.msra.mxu0 %v330
    %403 = vmatpush.bf16.msra.mxu0 %v326
    %404 = vmatpush.bf16.msra.mxu0 %v322
    %405 = vmatpush.bf16.msra.mxu0 %v318
    %406 = vmatpush.bf16.msra.mxu0 %v314
    %407 = vmatpush.bf16.msra.mxu0 %v310
    %408 = vmatpush.bf16.msra.mxu0 %v306
    %409 = vmatpush.bf16.msra.mxu0 %v302
    %410 = vmatmul.bf16.gmra.mxu0 0
    %v411 = vpop.f32.mrf.mxu0
    %v412 = vadd.f32 %v157, %v411
    %v413 = vpop.f32.mrf.mxu0
    %414 = vdwg.mxu0
    %v415 = vmul.f32 %v373, 0.5
    %v416 = vmul.f32 %v386, 0.5
    %v417 = vmul.f32 %v399, 0.5
    %v418 = vtanh.pop %v415
    %v419 = vtanh.pop %v416
    %v420 = vtanh.pop %v417
    %v421 = vadd.f32 %v418, 1.0
    %v422 = vadd.f32 %v419, 1.0
    %v423 = vadd.f32 %v420, 1.0
    %v424 = vmul.f32 %v421, 0.5
    %v425 = vmul.f32 %v422, 0.5
    %v426 = vmul.f32 %v423, 0.5
    %v427 = vtanh.pop %v412
    %v428 = vmul.f32 %v425, 0.0
    %v429 = vmul.f32 %v424, %v427
    %v430 = vadd.f32 %v428, %v429
    %v431 = vtanh.pop %v430
    %v432 = vmul.f32 %v426, %v431
    %v433 = vpack.c.bf16 %v432, %v432
    %v434 = vpack.c.bf16 0.0, 0.0
    %v435 = vld [vmem:[#allocation5] sm:$0xff]
    %v436 = vld [vmem:[#allocation5 + $0x8] sm:$0xff]
    %v437 = vld [vmem:[#allocation5 + $0x10] sm:$0xff]
    %v438 = vld [vmem:[#allocation5 + $0x18] sm:$0xff]
    %v439 = vld [vmem:[#allocation5 + $0x20] sm:$0xff]
    %v440 = vld [vmem:[#allocation5 + $0x28] sm:$0xff]
    %v441 = vld [vmem:[#allocation5 + $0x30] sm:$0xff]
    %v442 = vld [vmem:[#allocation5 + $0x38] sm:$0xff]
    %v443 = vld [vmem:[#allocation5 + $0x40] sm:$0xff]
    %v444 = vld [vmem:[#allocation5 + $0x48] sm:$0xff]
    %v445 = vld [vmem:[#allocation5 + $0x50] sm:$0xff]
    %v446 = vld [vmem:[#allocation5 + $0x58] sm:$0xff]
    %v447 = vld [vmem:[#allocation5 + $0x60] sm:$0xff]
    %v448 = vld [vmem:[#allocation5 + $0x68] sm:$0xff]
    %v449 = vld [vmem:[#allocation5 + $0x70] sm:$0xff]
    %v450 = vld [vmem:[#allocation5 + $0x78] sm:$0xff]
    %v451 = vld [vmem:[#allocation5 + $0x80] sm:$0xff]
    %v452 = vld [vmem:[#allocation5 + $0x88] sm:$0xff]
    %v453 = vld [vmem:[#allocation5 + $0x90] sm:$0xff]
    %v454 = vld [vmem:[#allocation5 + $0x98] sm:$0xff]
    %v455 = vld [vmem:[#allocation5 + $0xa0] sm:$0xff]
    %v456 = vld [vmem:[#allocation5 + $0xa8] sm:$0xff]
    %v457 = vld [vmem:[#allocation5 + $0xb0] sm:$0xff]
    %v458 = vld [vmem:[#allocation5 + $0xb8] sm:$0xff]
    %v459 = vld [vmem:[#allocation5 + $0xc0] sm:$0xff]
    %v460 = vld [vmem:[#allocation5 + $0xc8] sm:$0xff]
    %v461 = vld [vmem:[#allocation5 + $0xd0] sm:$0xff]
    %v462 = vld [vmem:[#allocation5 + $0xd8] sm:$0xff]
    %v463 = vld [vmem:[#allocation5 + $0xe0] sm:$0xff]
    %v464 = vld [vmem:[#allocation5 + $0xe8] sm:$0xff]
    %v465 = vld [vmem:[#allocation5 + $0xf0] sm:$0xff]
    %v466 = vld [vmem:[#allocation5 + $0xf8] sm:$0xff]
    %v467 = vld [vmem:[#allocation5 + $0x100] sm:$0xff]
    %v468 = vld [vmem:[#allocation5 + $0x108] sm:$0xff]
    %v469 = vld [vmem:[#allocation5 + $0x110] sm:$0xff]
    %v470 = vld [vmem:[#allocation5 + $0x118] sm:$0xff]
    %v471 = vld [vmem:[#allocation5 + $0x120] sm:$0xff]
    %v472 = vld [vmem:[#allocation5 + $0x128] sm:$0xff]
    %v473 = vld [vmem:[#allocation5 + $0x130] sm:$0xff]
    %v474 = vld [vmem:[#allocation5 + $0x138] sm:$0xff]
    %v475 = vld [vmem:[#allocation5 + $0x140] sm:$0xff]
    %v476 = vld [vmem:[#allocation5 + $0x148] sm:$0xff]
    %v477 = vld [vmem:[#allocation5 + $0x150] sm:$0xff]
    %v478 = vld [vmem:[#allocation5 + $0x158] sm:$0xff]
    %v479 = vld [vmem:[#allocation5 + $0x160] sm:$0xff]
    %v480 = vld [vmem:[#allocation5 + $0x168] sm:$0xff]
    %v481 = vld [vmem:[#allocation5 + $0x170] sm:$0xff]
    %v482 = vld [vmem:[#allocation5 + $0x178] sm:$0xff]
    %v483 = vld [vmem:[#allocation5 + $0x180] sm:$0xff]
    %v484 = vld [vmem:[#allocation5 + $0x188] sm:$0xff]
    %v485 = vld [vmem:[#allocation5 + $0x190] sm:$0xff]
    %v486 = vld [vmem:[#allocation5 + $0x198] sm:$0xff]
    %v487 = vld [vmem:[#allocation5 + $0x1a0] sm:$0xff]
    %v488 = vld [vmem:[#allocation5 + $0x1a8] sm:$0xff]
    %v489 = vld [vmem:[#allocation5 + $0x1b0] sm:$0xff]
    %v490 = vld [vmem:[#allocation5 + $0x1b8] sm:$0xff]
    %v491 = vld [vmem:[#allocation5 + $0x1c0] sm:$0xff]
    %v492 = vld [vmem:[#allocation5 + $0x1c8] sm:$0xff]
    %v493 = vld [vmem:[#allocation5 + $0x1d0] sm:$0xff]
    %v494 = vld [vmem:[#allocation5 + $0x1d8] sm:$0xff]
    %v495 = vld [vmem:[#allocation5 + $0x1e0] sm:$0xff]
    %v496 = vld [vmem:[#allocation5 + $0x1e8] sm:$0xff]
    %v497 = vld [vmem:[#allocation5 + $0x1f0] sm:$0xff]
    %v498 = vld [vmem:[#allocation5 + $0x1f8] sm:$0xff]
    %v563 = vunpack.c.l.b16 %v435
    %v564 = vunpack.c.h.b16 %v435
    %v565 = vunpack.c.l.b16 %v436
    %v566 = vunpack.c.h.b16 %v436
    %v567 = vunpack.c.l.b16 %v437
    %v568 = vunpack.c.h.b16 %v437
    %v569 = vunpack.c.l.b16 %v438
    %v570 = vunpack.c.h.b16 %v438
    %v571 = vunpack.c.l.b16 %v439
    %v572 = vunpack.c.h.b16 %v439
    %v573 = vunpack.c.l.b16 %v440
    %v574 = vunpack.c.h.b16 %v440
    %v575 = vunpack.c.l.b16 %v441
    %v576 = vunpack.c.h.b16 %v441
    %v577 = vunpack.c.l.b16 %v442
    %v578 = vunpack.c.h.b16 %v442
    %v579 = vunpack.c.l.b16 %v443
    %v580 = vunpack.c.h.b16 %v443
    %v581 = vunpack.c.l.b16 %v444
    %v582 = vunpack.c.h.b16 %v444
    %v583 = vunpack.c.l.b16 %v445
    %v584 = vunpack.c.h.b16 %v445
    %v585 = vunpack.c.l.b16 %v446
    %v586 = vunpack.c.h.b16 %v446
    %v587 = vunpack.c.l.b16 %v447
    %v588 = vunpack.c.h.b16 %v447
    %v589 = vunpack.c.l.b16 %v448
    %v590 = vunpack.c.h.b16 %v448
    %v591 = vunpack.c.l.b16 %v449
    %v592 = vunpack.c.h.b16 %v449
    %v593 = vunpack.c.l.b16 %v450
    %v594 = vunpack.c.h.b16 %v450
    %v595 = vunpack.c.l.b16 %v451
    %v596 = vunpack.c.h.b16 %v451
    %v597 = vunpack.c.l.b16 %v452
    %v598 = vunpack.c.h.b16 %v452
    %v599 = vunpack.c.l.b16 %v453
    %v600 = vunpack.c.h.b16 %v453
    %v601 = vunpack.c.l.b16 %v454
    %v602 = vunpack.c.h.b16 %v454
    %v603 = vunpack.c.l.b16 %v455
    %v604 = vunpack.c.h.b16 %v455
    %v605 = vunpack.c.l.b16 %v456
    %v606 = vunpack.c.h.b16 %v456
    %v607 = vunpack.c.l.b16 %v457
    %v608 = vunpack.c.h.b16 %v457
    %v609 = vunpack.c.l.b16 %v458
    %v610 = vunpack.c.h.b16 %v458
    %v611 = vunpack.c.l.b16 %v459
    %v612 = vunpack.c.h.b16 %v459
    %v613 = vunpack.c.l.b16 %v460
    %v614 = vunpack.c.h.b16 %v460
    %v615 = vunpack.c.l.b16 %v461
    %v616 = vunpack.c.h.b16 %v461
    %v617 = vunpack.c.l.b16 %v462
    %v618 = vunpack.c.h.b16 %v462
    %v619 = vunpack.c.l.b16 %v463
    %v620 = vunpack.c.h.b16 %v463
    %v621 = vunpack.c.l.b16 %v464
    %v622 = vunpack.c.h.b16 %v464
    %v623 = vunpack.c.l.b16 %v465
    %v624 = vunpack.c.h.b16 %v465
    %v625 = vunpack.c.l.b16 %v466
    %v626 = vunpack.c.h.b16 %v466
    %v627 = vunpack.c.l.b16 %v467
    %v628 = vunpack.c.h.b16 %v467
    %v629 = vunpack.c.l.b16 %v468
    %v630 = vunpack.c.h.b16 %v468
    %v631 = vunpack.c.l.b16 %v469
    %v632 = vunpack.c.h.b16 %v469
    %v633 = vunpack.c.l.b16 %v470
    %v634 = vunpack.c.h.b16 %v470
    %v635 = vunpack.c.l.b16 %v471
    %v636 = vunpack.c.h.b16 %v471
    %v637 = vunpack.c.l.b16 %v472
    %v638 = vunpack.c.h.b16 %v472
    %v639 = vunpack.c.l.b16 %v473
    %v640 = vunpack.c.h.b16 %v473
    %v641 = vunpack.c.l.b16 %v474
    %v642 = vunpack.c.h.b16 %v474
    %v643 = vunpack.c.l.b16 %v475
    %v644 = vunpack.c.h.b16 %v475
    %v645 = vunpack.c.l.b16 %v476
    %v646 = vunpack.c.h.b16 %v476
    %v647 = vunpack.c.l.b16 %v477
    %v648 = vunpack.c.h.b16 %v477
    %v649 = vunpack.c.l.b16 %v478
    %v650 = vunpack.c.h.b16 %v478
    %v651 = vunpack.c.l.b16 %v479
    %v652 = vunpack.c.h.b16 %v479
    %v653 = vunpack.c.l.b16 %v480
    %v654 = vunpack.c.h.b16 %v480
    %v655 = vunpack.c.l.b16 %v481
    %v656 = vunpack.c.h.b16 %v481
    %v657 = vunpack.c.l.b16 %v482
    %v658 = vunpack.c.h.b16 %v482
    %v659 = vunpack.c.l.b16 %v483
    %v660 = vunpack.c.h.b16 %v483
    %v661 = vunpack.c.l.b16 %v484
    %v662 = vunpack.c.h.b16 %v484
    %v663 = vunpack.c.l.b16 %v485
    %v664 = vunpack.c.h.b16 %v485
    %v665 = vunpack.c.l.b16 %v486
    %v666 = vunpack.c.h.b16 %v486
    %v667 = vunpack.c.l.b16 %v487
    %v668 = vunpack.c.h.b16 %v487
    %v669 = vunpack.c.l.b16 %v488
    %v670 = vunpack.c.h.b16 %v488
    %v671 = vunpack.c.l.b16 %v489
    %v672 = vunpack.c.h.b16 %v489
    %v673 = vunpack.c.l.b16 %v490
    %v674 = vunpack.c.h.b16 %v490
    %v675 = vunpack.c.l.b16 %v491
    %v676 = vunpack.c.h.b16 %v491
    %v677 = vunpack.c.l.b16 %v492
    %v678 = vunpack.c.h.b16 %v492
    %v679 = vunpack.c.l.b16 %v493
    %v680 = vunpack.c.h.b16 %v493
    %v681 = vunpack.c.l.b16 %v494
    %v682 = vunpack.c.h.b16 %v494
    %v683 = vunpack.c.l.b16 %v495
    %v684 = vunpack.c.h.b16 %v495
    %v685 = vunpack.c.l.b16 %v496
    %v686 = vunpack.c.h.b16 %v496
    %v687 = vunpack.c.l.b16 %v497
    %v688 = vunpack.c.h.b16 %v497
    %v689 = vunpack.c.l.b16 %v498
    %v690 = vunpack.c.h.b16 %v498
    %v691 = vpack.c.b16 %v567, %v563
    %v692 = vpack.c.b16 %v568, %v564
    %v693 = vpack.c.b16 %v569, %v565
    %v694 = vpack.c.b16 %v570, %v566
    %v695 = vpack.c.b16 %v575, %v571
    %v696 = vpack.c.b16 %v576, %v572
    %v697 = vpack.c.b16 %v577, %v573
    %v698 = vpack.c.b16 %v578, %v574
    %v699 = vpack.c.b16 %v583, %v579
    %v700 = vpack.c.b16 %v584, %v580
    %v701 = vpack.c.b16 %v585, %v581
    %v702 = vpack.c.b16 %v586, %v582
    %v703 = vpack.c.b16 %v591, %v587
    %v704 = vpack.c.b16 %v592, %v588
    %v705 = vpack.c.b16 %v593, %v589
    %v706 = vpack.c.b16 %v594, %v590
    %v707 = vpack.c.b16 %v599, %v595
    %v708 = vpack.c.b16 %v600, %v596
    %v709 = vpack.c.b16 %v601, %v597
    %v710 = vpack.c.b16 %v602, %v598
    %v711 = vpack.c.b16 %v607, %v603
    %v712 = vpack.c.b16 %v608, %v604
    %v713 = vpack.c.b16 %v609, %v605
    %v714 = vpack.c.b16 %v610, %v606
    %v715 = vpack.c.b16 %v615, %v611
    %v716 = vpack.c.b16 %v616, %v612
    %v717 = vpack.c.b16 %v617, %v613
    %v718 = vpack.c.b16 %v618, %v614
    %v719 = vpack.c.b16 %v623, %v619
    %v720 = vpack.c.b16 %v624, %v620
    %v721 = vpack.c.b16 %v625, %v621
    %v722 = vpack.c.b16 %v626, %v622
    %v723 = vpack.c.b16 %v631, %v627
    %v724 = vpack.c.b16 %v632, %v628
    %v725 = vpack.c.b16 %v633, %v629
    %v726 = vpack.c.b16 %v634, %v630
    %v727 = vpack.c.b16 %v639, %v635
    %v728 = vpack.c.b16 %v640, %v636
    %v729 = vpack.c.b16 %v641, %v637
    %v730 = vpack.c.b16 %v642, %v638
    %v731 = vpack.c.b16 %v647, %v643
    %v732 = vpack.c.b16 %v648, %v644
    %v733 = vpack.c.b16 %v649, %v645
    %v734 = vpack.c.b16 %v650, %v646
    %v735 = vpack.c.b16 %v655, %v651
    %v736 = vpack.c.b16 %v656, %v652
    %v737 = vpack.c.b16 %v657, %v653
    %v738 = vpack.c.b16 %v658, %v654
    %v739 = vpack.c.b16 %v663, %v659
    %v740 = vpack.c.b16 %v664, %v660
    %v741 = vpack.c.b16 %v665, %v661
    %v742 = vpack.c.b16 %v666, %v662
    %v743 = vpack.c.b16 %v671, %v667
    %v744 = vpack.c.b16 %v672, %v668
    %v745 = vpack.c.b16 %v673, %v669
    %v746 = vpack.c.b16 %v674, %v670
    %v747 = vpack.c.b16 %v679, %v675
    %v748 = vpack.c.b16 %v680, %v676
    %v749 = vpack.c.b16 %v681, %v677
    %v750 = vpack.c.b16 %v682, %v678
    %v751 = vpack.c.b16 %v687, %v683
    %v752 = vpack.c.b16 %v688, %v684
    %v753 = vpack.c.b16 %v689, %v685
    %v754 = vpack.c.b16 %v690, %v686
    %819 = vmatpush.bf16.msra.mxu0 %v719
    %820 = vmatpush.bf16.msra.mxu0 %v715
    %821 = vmatpush.bf16.msra.mxu0 %v711
    %822 = vmatpush.bf16.msra.mxu0 %v707
    %823 = vmatpush.bf16.msra.mxu0 %v703
    %824 = vmatpush.bf16.msra.mxu0 %v699
    %825 = vmatpush.bf16.msra.mxu0 %v695
    %826 = vmatpush.bf16.msra.mxu0 %v691
    %827 = vmatmul.bf16.gmra.mxu0 %v433
    %v828 = vpop.f32.mrf.mxu0
    %v829 = vadd.f32 %v163, %v828
    %v830 = vpop.f32.mrf.mxu0
    %831 = vdwg.mxu0
    %832 = vmatpush.bf16.msra.mxu0 %v751
    %833 = vmatpush.bf16.msra.mxu0 %v747
    %834 = vmatpush.bf16.msra.mxu0 %v743
    %835 = vmatpush.bf16.msra.mxu0 %v739
    %836 = vmatpush.bf16.msra.mxu0 %v735
    %837 = vmatpush.bf16.msra.mxu0 %v731
    %838 = vmatpush.bf16.msra.mxu0 %v727
    %839 = vmatpush.bf16.msra.mxu0 %v723
    %840 = vmatmul.bf16.gmra.mxu0 %v434
    %v841 = vpop.f32.mrf.mxu0
    %v842 = vadd.f32 %v829, %v841
    %v843 = vpop.f32.mrf.mxu0
    %844 = vdwg.mxu0
    %845 = vmatpush.bf16.msra.mxu0 %v720
    %846 = vmatpush.bf16.msra.mxu0 %v716
    %847 = vmatpush.bf16.msra.mxu0 %v712
    %848 = vmatpush.bf16.msra.mxu0 %v708
    %849 = vmatpush.bf16.msra.mxu0 %v704
    %850 = vmatpush.bf16.msra.mxu0 %v700
    %851 = vmatpush.bf16.msra.mxu0 %v696
    %852 = vmatpush.bf16.msra.mxu0 %v692
    %853 = vmatmul.bf16.gmra.mxu0 %v433
    %v854 = vpop.f32.mrf.mxu0
    %v855 = vadd.f32 %v164, %v854
    %v856 = vpop.f32.mrf.mxu0
    %857 = vdwg.mxu0
    %858 = vmatpush.bf16.msra.mxu0 %v752
    %859 = vmatpush.bf16.msra.mxu0 %v748
    %860 = vmatpush.bf16.msra.mxu0 %v744
    %861 = vmatpush.bf16.msra.mxu0 %v740
    %862 = vmatpush.bf16.msra.mxu0 %v736
    %863 = vmatpush.bf16.msra.mxu0 %v732
    %864 = vmatpush.bf16.msra.mxu0 %v728
    %865 = vmatpush.bf16.msra.mxu0 %v724
    %866 = vmatmul.bf16.gmra.mxu0 %v434
    %v867 = vpop.f32.mrf.mxu0
    %v868 = vadd.f32 %v855, %v867
    %v869 = vpop.f32.mrf.mxu0
    %870 = vdwg.mxu0
    %871 = vmatpush.bf16.msra.mxu0 %v721
    %872 = vmatpush.bf16.msra.mxu0 %v717
    %873 = vmatpush.bf16.msra.mxu0 %v713
    %874 = vmatpush.bf16.msra.mxu0 %v709
    %875 = vmatpush.bf16.msra.mxu0 %v705
    %876 = vmatpush.bf16.msra.mxu0 %v701
    %877 = vmatpush.bf16.msra.mxu0 %v697
    %878 = vmatpush.bf16.msra.mxu0 %v693
    %879 = vmatmul.bf16.gmra.mxu0 %v433
    %v880 = vpop.f32.mrf.mxu0
    %v881 = vadd.f32 %v165, %v880
    %v882 = vpop.f32.mrf.mxu0
    %883 = vdwg.mxu0
    %884 = vmatpush.bf16.msra.mxu0 %v753
    %885 = vmatpush.bf16.msra.mxu0 %v749
    %886 = vmatpush.bf16.msra.mxu0 %v745
    %887 = vmatpush.bf16.msra.mxu0 %v741
    %888 = vmatpush.bf16.msra.mxu0 %v737
    %889 = vmatpush.bf16.msra.mxu0 %v733
    %890 = vmatpush.bf16.msra.mxu0 %v729
    %891 = vmatpush.bf16.msra.mxu0 %v725
    %892 = vmatmul.bf16.gmra.mxu0 %v434
    %v893 = vpop.f32.mrf.mxu0
    %v894 = vadd.f32 %v881, %v893
    %v895 = vpop.f32.mrf.mxu0
    %896 = vdwg.mxu0
    %897 = vmatpush.bf16.msra.mxu0 %v722
    %898 = vmatpush.bf16.msra.mxu0 %v718
    %899 = vmatpush.bf16.msra.mxu0 %v714
    %900 = vmatpush.bf16.msra.mxu0 %v710
    %901 = vmatpush.bf16.msra.mxu0 %v706
    %902 = vmatpush.bf16.msra.mxu0 %v702
    %903 = vmatpush.bf16.msra.mxu0 %v698
    %904 = vmatpush.bf16.msra.mxu0 %v694
    %905 = vmatmul.bf16.gmra.mxu0 %v433
    %v906 = vpop.f32.mrf.mxu0
    %v907 = vadd.f32 %v166, %v906
    %v908 = vpop.f32.mrf.mxu0
    %909 = vdwg.mxu0
    %910 = vmatpush.bf16.msra.mxu0 %v754
    %911 = vmatpush.bf16.msra.mxu0 %v750
    %912 = vmatpush.bf16.msra.mxu0 %v746
    %913 = vmatpush.bf16.msra.mxu0 %v742
    %914 = vmatpush.bf16.msra.mxu0 %v738
    %915 = vmatpush.bf16.msra.mxu0 %v734
    %916 = vmatpush.bf16.msra.mxu0 %v730
    %917 = vmatpush.bf16.msra.mxu0 %v726
    %918 = vmatmul.bf16.gmra.mxu0 %v434
    %v919 = vpop.f32.mrf.mxu0
    %v920 = vadd.f32 %v907, %v919
    %v921 = vpop.f32.mrf.mxu0
    %922 = vdwg.mxu0
    %v923 = vmul.f32 %v842, 0.5
    %v924 = vmul.f32 %v868, 0.5
    %v925 = vmul.f32 %v894, 0.5
    %v926 = vtanh.pop %v923
    %v927 = vtanh.pop %v924
    %v928 = vtanh.pop %v925
    %v929 = vadd.f32 %v926, 1.0
    %v930 = vadd.f32 %v927, 1.0
    %v931 = vadd.f32 %v928, 1.0
    %v932 = vmul.f32 %v929, 0.5
    %v933 = vmul.f32 %v930, 0.5
    %v934 = vmul.f32 %v931, 0.5
    %v935 = vtanh.pop %v920
    %v936 = vmul.f32 %v933, 0.0
    %v937 = vmul.f32 %v932, %v935
    %v938 = vadd.f32 %v936, %v937
    %v939 = vtanh.pop %v938
    %v940 = vmul.f32 %v934, %v939
    %v945 = vrot.slane %v115, 2
    %v946 = vrot.slane %v129, 2
    %v947 = vrot.slane %v143, 2
    %v948 = vrot.slane %v157, 2
    %953 = vmatpush.bf16.msra.mxu0 %v327
    %954 = vmatpush.bf16.msra.mxu0 %v323
    %955 = vmatpush.bf16.msra.mxu0 %v319
    %956 = vmatpush.bf16.msra.mxu0 %v315
    %957 = vmatpush.bf16.msra.mxu0 %v311
    %958 = vmatpush.bf16.msra.mxu0 %v307
    %959 = vmatpush.bf16.msra.mxu0 %v303
    %960 = vmatpush.bf16.msra.mxu0 %v299
    %961 = vmatmul.bf16.gmra.mxu0 %v433
    %v962 = vpop.f32.mrf.mxu0
    %v963 = vadd.f32 %v945, %v962
    %v964 = vpop.f32.mrf.mxu0
    %965 = vdwg.mxu0
    %966 = vmatpush.bf16.msra.mxu0 %v328
    %967 = vmatpush.bf16.msra.mxu0 %v324
    %968 = vmatpush.bf16.msra.mxu0 %v320
    %969 = vmatpush.bf16.msra.mxu0 %v316
    %970 = vmatpush.bf16.msra.mxu0 %v312
    %971 = vmatpush.bf16.msra.mxu0 %v308
    %972 = vmatpush.bf16.msra.mxu0 %v304
    %973 = vmatpush.bf16.msra.mxu0 %v300
    %974 = vmatmul.bf16.gmra.mxu0 %v433
    %v975 = vpop.f32.mrf.mxu0
    %v976 = vadd.f32 %v946, %v975
    %v977 = vpop.f32.mrf.mxu0
    %978 = vdwg.mxu0
    %979 = vmatpush.bf16.msra.mxu0 %v329
    %980 = vmatpush.bf16.msra.mxu0 %v325
    %981 = vmatpush.bf16.msra.mxu0 %v321
    %982 = vmatpush.bf16.msra.mxu0 %v317
    %983 = vmatpush.bf16.msra.mxu0 %v313
    %984 = vmatpush.bf16.msra.mxu0 %v309
    %985 = vmatpush.bf16.msra.mxu0 %v305
    %986 = vmatpush.bf16.msra.mxu0 %v301
    %987 = vmatmul.bf16.gmra.mxu0 %v433
    %v988 = vpop.f32.mrf.mxu0
    %v989 = vadd.f32 %v947, %v988
    %v990 = vpop.f32.mrf.mxu0
    %991 = vdwg.mxu0
    %992 = vmatpush.bf16.msra.mxu0 %v330
    %993 = vmatpush.bf16.msra.mxu0 %v326
    %994 = vmatpush.bf16.msra.mxu0 %v322
    %995 = vmatpush.bf16.msra.mxu0 %v318
    %996 = vmatpush.bf16.msra.mxu0 %v314
    %997 = vmatpush.bf16.msra.mxu0 %v310
    %998 = vmatpush.bf16.msra.mxu0 %v306
    %999 = vmatpush.bf16.msra.mxu0 %v302
    %1000 = vmatmul.bf16.gmra.mxu0 %v433
    %v1001 = vpop.f32.mrf.mxu0
    %v1002 = vadd.f32 %v948, %v1001
    %v1003 = vpop.f32.mrf.mxu0
    %1004 = vdwg.mxu0
    %v1005 = vmul.f32 %v963, 0.5
    %v1006 = vmul.f32 %v976, 0.5
    %v1007 = vmul.f32 %v989, 0.5
    %v1008 = vtanh.pop %v1005
    %v1009 = vtanh.pop %v1006
    %v1010 = vtanh.pop %v1007
    %v1011 = vadd.f32 %v1008, 1.0
    %v1012 = vadd.f32 %v1009, 1.0
    %v1013 = vadd.f32 %v1010, 1.0
    %v1014 = vmul.f32 %v1011, 0.5
    %v1015 = vmul.f32 %v1012, 0.5
    %v1016 = vmul.f32 %v1013, 0.5
    %v1017 = vtanh.pop %v1002
    %v1018 = vmul.f32 %v1015, %v430
    %v1019 = vmul.f32 %v1014, %v1017
    %v1020 = vadd.f32 %v1018, %v1019
    %v1021 = vtanh.pop %v1020
    %v1022 = vmul.f32 %v1016, %v1021
    %v1023 = vpack.c.bf16 %v1022, %v1022
    %v1024 = vpack.c.bf16 %v940, %v940
    %1025 = vmatpush.bf16.msra.mxu0 %v719
    %1026 = vmatpush.bf16.msra.mxu0 %v715
    %1027 = vmatpush.bf16.msra.mxu0 %v711
    %1028 = vmatpush.bf16.msra.mxu0 %v707
    %1029 = vmatpush.bf16.msra.mxu0 %v703
    %1030 = vmatpush.bf16.msra.mxu0 %v699
    %1031 = vmatpush.bf16.msra.mxu0 %v695
    %1032 = vmatpush.bf16.msra.mxu0 %v691
    %1033 = vmatmul.bf16.gmra.mxu0 %v1023
    %v1034 = vpop.f32.mrf.mxu0
    %v1035 = vadd.f32 %v163, %v1034
    %v1036 = vpop.f32.mrf.mxu0
    %1037 = vdwg.mxu0
    %1038 = vmatpush.bf16.msra.mxu0 %v751
    %1039 = vmatpush.bf16.msra.mxu0 %v747
    %1040 = vmatpush.bf16.msra.mxu0 %v743
    %1041 = vmatpush.bf16.msra.mxu0 %v739
    %1042 = vmatpush.bf16.msra.mxu0 %v735
    %1043 = vmatpush.bf16.msra.mxu0 %v731
    %1044 = vmatpush.bf16.msra.mxu0 %v727
    %1045 = vmatpush.bf16.msra.mxu0 %v723
    %1046 = vmatmul.bf16.gmra.mxu0 %v1024
    %v1047 = vpop.f32.mrf.mxu0
    %v1048 = vadd.f32 %v1035, %v1047
    %v1049 = vpop.f32.mrf.mxu0
    %1050 = vdwg.mxu0
    %1051 = vmatpush.bf16.msra.mxu0 %v720
    %1052 = vmatpush.bf16.msra.mxu0 %v716
    %1053 = vmatpush.bf16.msra.mxu0 %v712
    %1054 = vmatpush.bf16.msra.mxu0 %v708
    %1055 = vmatpush.bf16.msra.mxu0 %v704
    %1056 = vmatpush.bf16.msra.mxu0 %v700
    %1057 = vmatpush.bf16.msra.mxu0 %v696
    %1058 = vmatpush.bf16.msra.mxu0 %v692
    %1059 = vmatmul.bf16.gmra.mxu0 %v1023
    %v1060 = vpop.f32.mrf.mxu0
    %v1061 = vadd.f32 %v164, %v1060
    %v1062 = vpop.f32.mrf.mxu0
    %1063 = vdwg.mxu0
    %1064 = vmatpush.bf16.msra.mxu0 %v752
    %1065 = vmatpush.bf16.msra.mxu0 %v748
    %1066 = vmatpush.bf16.msra.mxu0 %v744
    %1067 = vmatpush.bf16.msra.mxu0 %v740
    %1068 = vmatpush.bf16.msra.mxu0 %v736
    %1069 = vmatpush.bf16.msra.mxu0 %v732
    %1070 = vmatpush.bf16.msra.mxu0 %v728
    %1071 = vmatpush.bf16.msra.mxu0 %v724
    %1072 = vmatmul.bf16.gmra.mxu0 %v1024
    %v1073 = vpop.f32.mrf.mxu0
    %v1074 = vadd.f32 %v1061, %v1073
    %v1075 = vpop.f32.mrf.mxu0
    %1076 = vdwg.mxu0
    %1077 = vmatpush.bf16.msra.mxu0 %v721
    %1078 = vmatpush.bf16.msra.mxu0 %v717
    %1079 = vmatpush.bf16.msra.mxu0 %v713
    %1080 = vmatpush.bf16.msra.mxu0 %v709
    %1081 = vmatpush.bf16.msra.mxu0 %v705
    %1082 = vmatpush.bf16.msra.mxu0 %v701
    %1083 = vmatpush.bf16.msra.mxu0 %v697
    %1084 = vmatpush.bf16.msra.mxu0 %v693
    %1085 = vmatmul.bf16.gmra.mxu0 %v1023
    %v1086 = vpop.f32.mrf.mxu0
    %v1087 = vadd.f32 %v165, %v1086
    %v1088 = vpop.f32.mrf.mxu0
    %1089 = vdwg.mxu0
    %1090 = vmatpush.bf16.msra.mxu0 %v753
    %1091 = vmatpush.bf16.msra.mxu0 %v749
    %1092 = vmatpush.bf16.msra.mxu0 %v745
    %1093 = vmatpush.bf16.msra.mxu0 %v741
    %1094 = vmatpush.bf16.msra.mxu0 %v737
    %1095 = vmatpush.bf16.msra.mxu0 %v733
    %1096 = vmatpush.bf16.msra.mxu0 %v729
    %1097 = vmatpush.bf16.msra.mxu0 %v725
    %1098 = vmatmul.bf16.gmra.mxu0 %v1024
    %v1099 = vpop.f32.mrf.mxu0
    %v1100 = vadd.f32 %v1087, %v1099
    %v1101 = vpop.f32.mrf.mxu0
    %1102 = vdwg.mxu0
    %1103 = vmatpush.bf16.msra.mxu0 %v722
    %1104 = vmatpush.bf16.msra.mxu0 %v718
    %1105 = vmatpush.bf16.msra.mxu0 %v714
    %1106 = vmatpush.bf16.msra.mxu0 %v710
    %1107 = vmatpush.bf16.msra.mxu0 %v706
    %1108 = vmatpush.bf16.msra.mxu0 %v702
    %1109 = vmatpush.bf16.msra.mxu0 %v698
    %1110 = vmatpush.bf16.msra.mxu0 %v694
    %1111 = vmatmul.bf16.gmra.mxu0 %v1023
    %v1112 = vpop.f32.mrf.mxu0
    %v1113 = vadd.f32 %v166, %v1112
    %v1114 = vpop.f32.mrf.mxu0
    %1115 = vdwg.mxu0
    %1116 = vmatpush.bf16.msra.mxu0 %v754
    %1117 = vmatpush.bf16.msra.mxu0 %v750
    %1118 = vmatpush.bf16.msra.mxu0 %v746
    %1119 = vmatpush.bf16.msra.mxu0 %v742
    %1120 = vmatpush.bf16.msra.mxu0 %v738
    %1121 = vmatpush.bf16.msra.mxu0 %v734
    %1122 = vmatpush.bf16.msra.mxu0 %v730
    %1123 = vmatpush.bf16.msra.mxu0 %v726
    %1124 = vmatmul.bf16.gmra.mxu0 %v1024
    %v1125 = vpop.f32.mrf.mxu0
    %v1126 = vadd.f32 %v1113, %v1125
    %v1127 = vpop.f32.mrf.mxu0
    %1128 = vdwg.mxu0
    %v1129 = vmul.f32 %v1048, 0.5
    %v1130 = vmul.f32 %v1074, 0.5
    %v1131 = vmul.f32 %v1100, 0.5
    %v1132 = vtanh.pop %v1129
    %v1133 = vtanh.pop %v1130
    %v1134 = vtanh.pop %v1131
    %v1135 = vadd.f32 %v1132, 1.0
    %v1136 = vadd.f32 %v1133, 1.0
    %v1137 = vadd.f32 %v1134, 1.0
    %v1138 = vmul.f32 %v1135, 0.5
    %v1139 = vmul.f32 %v1136, 0.5
    %v1140 = vmul.f32 %v1137, 0.5
    %v1141 = vtanh.pop %v1126
    %v1142 = vmul.f32 %v1139, %v938
    %v1143 = vmul.f32 %v1138, %v1141
    %v1144 = vadd.f32 %v1142, %v1143
    %v1145 = vtanh.pop %v1144
    %v1146 = vmul.f32 %v1140, %v1145
    %v1147 = vrot.slane %v115, 4
    %v1148 = vrot.slane %v129, 4
    %v1149 = vrot.slane %v143, 4
    %v1150 = vrot.slane %v157, 4
    %1155 = vmatpush.bf16.msra.mxu0 %v327
    %1156 = vmatpush.bf16.msra.mxu0 %v323
    %1157 = vmatpush.bf16.msra.mxu0 %v319
    %1158 = vmatpush.bf16.msra.mxu0 %v315
    %1159 = vmatpush.bf16.msra.mxu0 %v311
    %1160 = vmatpush.bf16.msra.mxu0 %v307
    %1161 = vmatpush.bf16.msra.mxu0 %v303
    %1162 = vmatpush.bf16.msra.mxu0 %v299
    %1163 = vmatmul.bf16.gmra.mxu0 %v1023
    %v1164 = vpop.f32.mrf.mxu0
    %v1165 = vadd.f32 %v1147, %v1164
    %v1166 = vpop.f32.mrf.mxu0
    %1167 = vdwg.mxu0
    %1168 = vmatpush.bf16.msra.mxu0 %v328
    %1169 = vmatpush.bf16.msra.mxu0 %v324
    %1170 = vmatpush.bf16.msra.mxu0 %v320
    %1171 = vmatpush.bf16.msra.mxu0 %v316
    %1172 = vmatpush.bf16.msra.mxu0 %v312
    %1173 = vmatpush.bf16.msra.mxu0 %v308
    %1174 = vmatpush.bf16.msra.mxu0 %v304
    %1175 = vmatpush.bf16.msra.mxu0 %v300
    %1176 = vmatmul.bf16.gmra.mxu0 %v1023
    %v1177 = vpop.f32.mrf.mxu0
    %v1178 = vadd.f32 %v1148, %v1177
    %v1179 = vpop.f32.mrf.mxu0
    %1180 = vdwg.mxu0
    %1181 = vmatpush.bf16.msra.mxu0 %v329
    %1182 = vmatpush.bf16.msra.mxu0 %v325
    %1183 = vmatpush.bf16.msra.mxu0 %v321
    %1184 = vmatpush.bf16.msra.mxu0 %v317
    %1185 = vmatpush.bf16.msra.mxu0 %v313
    %1186 = vmatpush.bf16.msra.mxu0 %v309
    %1187 = vmatpush.bf16.msra.mxu0 %v305
    %1188 = vmatpush.bf16.msra.mxu0 %v301
    %1189 = vmatmul.bf16.gmra.mxu0 %v1023
    %v1190 = vpop.f32.mrf.mxu0
    %v1191 = vadd.f32 %v1149, %v1190
    %v1192 = vpop.f32.mrf.mxu0
    %1193 = vdwg.mxu0
    %1194 = vmatpush.bf16.msra.mxu0 %v330
    %1195 = vmatpush.bf16.msra.mxu0 %v326
    %1196 = vmatpush.bf16.msra.mxu0 %v322
    %1197 = vmatpush.bf16.msra.mxu0 %v318
    %1198 = vmatpush.bf16.msra.mxu0 %v314
    %1199 = vmatpush.bf16.msra.mxu0 %v310
    %1200 = vmatpush.bf16.msra.mxu0 %v306
    %1201 = vmatpush.bf16.msra.mxu0 %v302
    %1202 = vmatmul.bf16.gmra.mxu0 %v1023
    %v1203 = vpop.f32.mrf.mxu0
    %v1204 = vadd.f32 %v1150, %v1203
    %v1205 = vpop.f32.mrf.mxu0
    %1206 = vdwg.mxu0
    %v1207 = vmul.f32 %v1165, 0.5
    %v1208 = vmul.f32 %v1178, 0.5
    %v1209 = vmul.f32 %v1191, 0.5
    %v1210 = vtanh.pop %v1207
    %v1211 = vtanh.pop %v1208
    %v1212 = vtanh.pop %v1209
    %v1213 = vadd.f32 %v1210, 1.0
    %v1214 = vadd.f32 %v1211, 1.0
    %v1215 = vadd.f32 %v1212, 1.0
    %v1216 = vmul.f32 %v1213, 0.5
    %v1217 = vmul.f32 %v1214, 0.5
    %v1218 = vmul.f32 %v1215, 0.5
    %v1219 = vtanh.pop %v1204
    %v1220 = vmul.f32 %v1217, %v1020
    %v1221 = vmul.f32 %v1216, %v1219
    %v1222 = vadd.f32 %v1220, %v1221
    %v1223 = vtanh.pop %v1222
    %v1224 = vmul.f32 %v1218, %v1223
    %v1225 = vpack.c.bf16 %v1224, %v1224
    %v1226 = vpack.c.bf16 %v1146, %v1146
    %1227 = vmatpush.bf16.msra.mxu0 %v719
    %1228 = vmatpush.bf16.msra.mxu0 %v715
    %1229 = vmatpush.bf16.msra.mxu0 %v711
    %1230 = vmatpush.bf16.msra.mxu0 %v707
    %1231 = vmatpush.bf16.msra.mxu0 %v703
    %1232 = vmatpush.bf16.msra.mxu0 %v699
    %1233 = vmatpush.bf16.msra.mxu0 %v695
    %1234 = vmatpush.bf16.msra.mxu0 %v691
    %1235 = vmatmul.bf16.gmra.mxu0 %v1225
    %v1236 = vpop.f32.mrf.mxu0
    %v1237 = vadd.f32 %v163, %v1236
    %v1238 = vpop.f32.mrf.mxu0
    %1239 = vdwg.mxu0
    %1240 = vmatpush.bf16.msra.mxu0 %v751
    %1241 = vmatpush.bf16.msra.mxu0 %v747
    %1242 = vmatpush.bf16.msra.mxu0 %v743
    %1243 = vmatpush.bf16.msra.mxu0 %v739
    %1244 = vmatpush.bf16.msra.mxu0 %v735
    %1245 = vmatpush.bf16.msra.mxu0 %v731
    %1246 = vmatpush.bf16.msra.mxu0 %v727
    %1247 = vmatpush.bf16.msra.mxu0 %v723
    %1248 = vmatmul.bf16.gmra.mxu0 %v1226
    %v1249 = vpop.f32.mrf.mxu0
    %v1250 = vadd.f32 %v1237, %v1249
    %v1251 = vpop.f32.mrf.mxu0
    %1252 = vdwg.mxu0
    %1253 = vmatpush.bf16.msra.mxu0 %v720
    %1254 = vmatpush.bf16.msra.mxu0 %v716
    %1255 = vmatpush.bf16.msra.mxu0 %v712
    %1256 = vmatpush.bf16.msra.mxu0 %v708
    %1257 = vmatpush.bf16.msra.mxu0 %v704
    %1258 = vmatpush.bf16.msra.mxu0 %v700
    %1259 = vmatpush.bf16.msra.mxu0 %v696
    %1260 = vmatpush.bf16.msra.mxu0 %v692
    %1261 = vmatmul.bf16.gmra.mxu0 %v1225
    %v1262 = vpop.f32.mrf.mxu0
    %v1263 = vadd.f32 %v164, %v1262
    %v1264 = vpop.f32.mrf.mxu0
    %1265 = vdwg.mxu0
    %1266 = vmatpush.bf16.msra.mxu0 %v752
    %1267 = vmatpush.bf16.msra.mxu0 %v748
    %1268 = vmatpush.bf16.msra.mxu0 %v744
    %1269 = vmatpush.bf16.msra.mxu0 %v740
    %1270 = vmatpush.bf16.msra.mxu0 %v736
    %1271 = vmatpush.bf16.msra.mxu0 %v732
    %1272 = vmatpush.bf16.msra.mxu0 %v728
    %1273 = vmatpush.bf16.msra.mxu0 %v724
    %1274 = vmatmul.bf16.gmra.mxu0 %v1226
    %v1275 = vpop.f32.mrf.mxu0
    %v1276 = vadd.f32 %v1263, %v1275
    %v1277 = vpop.f32.mrf.mxu0
    %1278 = vdwg.mxu0
    %1279 = vmatpush.bf16.msra.mxu0 %v721
    %1280 = vmatpush.bf16.msra.mxu0 %v717
    %1281 = vmatpush.bf16.msra.mxu0 %v713
    %1282 = vmatpush.bf16.msra.mxu0 %v709
    %1283 = vmatpush.bf16.msra.mxu0 %v705
    %1284 = vmatpush.bf16.msra.mxu0 %v701
    %1285 = vmatpush.bf16.msra.mxu0 %v697
    %1286 = vmatpush.bf16.msra.mxu0 %v693
    %1287 = vmatmul.bf16.gmra.mxu0 %v1225
    %v1288 = vpop.f32.mrf.mxu0
    %v1289 = vadd.f32 %v165, %v1288
    %v1290 = vpop.f32.mrf.mxu0
    %1291 = vdwg.mxu0
    %1292 = vmatpush.bf16.msra.mxu0 %v753
    %1293 = vmatpush.bf16.msra.mxu0 %v749
    %1294 = vmatpush.bf16.msra.mxu0 %v745
    %1295 = vmatpush.bf16.msra.mxu0 %v741
    %1296 = vmatpush.bf16.msra.mxu0 %v737
    %1297 = vmatpush.bf16.msra.mxu0 %v733
    %1298 = vmatpush.bf16.msra.mxu0 %v729
    %1299 = vmatpush.bf16.msra.mxu0 %v725
    %1300 = vmatmul.bf16.gmra.mxu0 %v1226
    %v1301 = vpop.f32.mrf.mxu0
    %v1302 = vadd.f32 %v1289, %v1301
    %v1303 = vpop.f32.mrf.mxu0
    %1304 = vdwg.mxu0
    %1305 = vmatpush.bf16.msra.mxu0 %v722
    %1306 = vmatpush.bf16.msra.mxu0 %v718
    %1307 = vmatpush.bf16.msra.mxu0 %v714
    %1308 = vmatpush.bf16.msra.mxu0 %v710
    %1309 = vmatpush.bf16.msra.mxu0 %v706
    %1310 = vmatpush.bf16.msra.mxu0 %v702
    %1311 = vmatpush.bf16.msra.mxu0 %v698
    %1312 = vmatpush.bf16.msra.mxu0 %v694
    %1313 = vmatmul.bf16.gmra.mxu0 %v1225
    %v1314 = vpop.f32.mrf.mxu0
    %v1315 = vadd.f32 %v166, %v1314
    %v1316 = vpop.f32.mrf.mxu0
    %1317 = vdwg.mxu0
    %1318 = vmatpush.bf16.msra.mxu0 %v754
    %1319 = vmatpush.bf16.msra.mxu0 %v750
    %1320 = vmatpush.bf16.msra.mxu0 %v746
    %1321 = vmatpush.bf16.msra.mxu0 %v742
    %1322 = vmatpush.bf16.msra.mxu0 %v738
    %1323 = vmatpush.bf16.msra.mxu0 %v734
    %1324 = vmatpush.bf16.msra.mxu0 %v730
    %1325 = vmatpush.bf16.msra.mxu0 %v726
    %1326 = vmatmul.bf16.gmra.mxu0 %v1226
    %v1327 = vpop.f32.mrf.mxu0
    %v1328 = vadd.f32 %v1315, %v1327
    %v1329 = vpop.f32.mrf.mxu0
    %1330 = vdwg.mxu0
    %v1331 = vmul.f32 %v1250, 0.5
    %v1332 = vmul.f32 %v1276, 0.5
    %v1333 = vmul.f32 %v1302, 0.5
    %v1334 = vtanh.pop %v1331
    %v1335 = vtanh.pop %v1332
    %v1336 = vtanh.pop %v1333
    %v1337 = vadd.f32 %v1334, 1.0
    %v1338 = vadd.f32 %v1335, 1.0
    %v1339 = vadd.f32 %v1336, 1.0
    %v1340 = vmul.f32 %v1337, 0.5
    %v1341 = vmul.f32 %v1338, 0.5
    %v1342 = vmul.f32 %v1339, 0.5
    %v1343 = vtanh.pop %v1328
    %v1344 = vmul.f32 %v1341, %v1144
    %v1345 = vmul.f32 %v1340, %v1343
    %v1346 = vadd.f32 %v1344, %v1345
    %v1347 = vtanh.pop %v1346
    %v1348 = vmul.f32 %v1342, %v1347
    %v1349 = vrot.slane %v115, 6
    %v1350 = vrot.slane %v129, 6
    %v1351 = vrot.slane %v143, 6
    %v1352 = vrot.slane %v157, 6
    %1357 = vmatpush.bf16.msra.mxu0 %v327
    %1358 = vmatpush.bf16.msra.mxu0 %v323
    %1359 = vmatpush.bf16.msra.mxu0 %v319
    %1360 = vmatpush.bf16.msra.mxu0 %v315
    %1361 = vmatpush.bf16.msra.mxu0 %v311
    %1362 = vmatpush.bf16.msra.mxu0 %v307
    %1363 = vmatpush.bf16.msra.mxu0 %v303
    %1364 = vmatpush.bf16.msra.mxu0 %v299
    %1365 = vmatmul.bf16.gmra.mxu0 %v1225
    %v1366 = vpop.f32.mrf.mxu0
    %v1367 = vadd.f32 %v1349, %v1366
    %v1368 = vpop.f32.mrf.mxu0
    %1369 = vdwg.mxu0
    %1370 = vmatpush.bf16.msra.mxu0 %v328
    %1371 = vmatpush.bf16.msra.mxu0 %v324
    %1372 = vmatpush.bf16.msra.mxu0 %v320
    %1373 = vmatpush.bf16.msra.mxu0 %v316
    %1374 = vmatpush.bf16.msra.mxu0 %v312
    %1375 = vmatpush.bf16.msra.mxu0 %v308
    %1376 = vmatpush.bf16.msra.mxu0 %v304
    %1377 = vmatpush.bf16.msra.mxu0 %v300
    %1378 = vmatmul.bf16.gmra.mxu0 %v1225
    %v1379 = vpop.f32.mrf.mxu0
    %v1380 = vadd.f32 %v1350, %v1379
    %v1381 = vpop.f32.mrf.mxu0
    %1382 = vdwg.mxu0
    %1383 = vmatpush.bf16.msra.mxu0 %v329
    %1384 = vmatpush.bf16.msra.mxu0 %v325
    %1385 = vmatpush.bf16.msra.mxu0 %v321
    %1386 = vmatpush.bf16.msra.mxu0 %v317
    %1387 = vmatpush.bf16.msra.mxu0 %v313
    %1388 = vmatpush.bf16.msra.mxu0 %v309
    %1389 = vmatpush.bf16.msra.mxu0 %v305
    %1390 = vmatpush.bf16.msra.mxu0 %v301
    %1391 = vmatmul.bf16.gmra.mxu0 %v1225
    %v1392 = vpop.f32.mrf.mxu0
    %v1393 = vadd.f32 %v1351, %v1392
    %v1394 = vpop.f32.mrf.mxu0
    %1395 = vdwg.mxu0
    %1396 = vmatpush.bf16.msra.mxu0 %v330
    %1397 = vmatpush.bf16.msra.mxu0 %v326
    %1398 = vmatpush.bf16.msra.mxu0 %v322
    %1399 = vmatpush.bf16.msra.mxu0 %v318
    %1400 = vmatpush.bf16.msra.mxu0 %v314
    %1401 = vmatpush.bf16.msra.mxu0 %v310
    %1402 = vmatpush.bf16.msra.mxu0 %v306
    %1403 = vmatpush.bf16.msra.mxu0 %v302
    %1404 = vmatmul.bf16.gmra.mxu0 %v1225
    %v1405 = vpop.f32.mrf.mxu0
    %v1406 = vadd.f32 %v1352, %v1405
    %v1407 = vpop.f32.mrf.mxu0
    %1408 = vdwg.mxu0
    %v1409 = vmul.f32 %v1367, 0.5
    %v1410 = vmul.f32 %v1380, 0.5
    %v1411 = vmul.f32 %v1393, 0.5
    %v1412 = vtanh.pop %v1409
    %v1413 = vtanh.pop %v1410
    %v1414 = vtanh.pop %v1411
    %v1415 = vadd.f32 %v1412, 1.0
    %v1416 = vadd.f32 %v1413, 1.0
    %v1417 = vadd.f32 %v1414, 1.0
    %v1418 = vmul.f32 %v1415, 0.5
    %v1419 = vmul.f32 %v1416, 0.5
    %v1420 = vmul.f32 %v1417, 0.5
    %v1421 = vtanh.pop %v1406
    %v1422 = vmul.f32 %v1419, %v1222
    %v1423 = vmul.f32 %v1418, %v1421
    %v1424 = vadd.f32 %v1422, %v1423
    %v1425 = vtanh.pop %v1424
    %v1426 = vmul.f32 %v1420, %v1425
    %v1427 = vpack.c.bf16 %v1426, %v1426
    %v1428 = vpack.c.bf16 %v1348, %v1348
    %1429 = vmatpush.bf16.msra.mxu0 %v719
    %1430 = vmatpush.bf16.msra.mxu0 %v715
    %1431 = vmatpush.bf16.msra.mxu0 %v711
    %1432 = vmatpush.bf16.msra.mxu0 %v707
    %1433 = vmatpush.bf16.msra.mxu0 %v703
    %1434 = vmatpush.bf16.msra.mxu0 %v699
    %1435 = vmatpush.bf16.msra.mxu0 %v695
    %1436 = vmatpush.bf16.msra.mxu0 %v691
    %1437 = vmatmul.bf16.gmra.mxu0 %v1427
    %v1438 = vpop.f32.mrf.mxu0
    %v1439 = vadd.f32 %v163, %v1438
    %v1440 = vpop.f32.mrf.mxu0
    %1441 = vdwg.mxu0
    %1442 = vmatpush.bf16.msra.mxu0 %v751
    %1443 = vmatpush.bf16.msra.mxu0 %v747
    %1444 = vmatpush.bf16.msra.mxu0 %v743
    %1445 = vmatpush.bf16.msra.mxu0 %v739
    %1446 = vmatpush.bf16.msra.mxu0 %v735
    %1447 = vmatpush.bf16.msra.mxu0 %v731
    %1448 = vmatpush.bf16.msra.mxu0 %v727
    %1449 = vmatpush.bf16.msra.mxu0 %v723
    %1450 = vmatmul.bf16.gmra.mxu0 %v1428
    %v1451 = vpop.f32.mrf.mxu0
    %v1452 = vadd.f32 %v1439, %v1451
    %v1453 = vpop.f32.mrf.mxu0
    %1454 = vdwg.mxu0
    %1455 = vmatpush.bf16.msra.mxu0 %v720
    %1456 = vmatpush.bf16.msra.mxu0 %v716
    %1457 = vmatpush.bf16.msra.mxu0 %v712
    %1458 = vmatpush.bf16.msra.mxu0 %v708
    %1459 = vmatpush.bf16.msra.mxu0 %v704
    %1460 = vmatpush.bf16.msra.mxu0 %v700
    %1461 = vmatpush.bf16.msra.mxu0 %v696
    %1462 = vmatpush.bf16.msra.mxu0 %v692
    %1463 = vmatmul.bf16.gmra.mxu0 %v1427
    %v1464 = vpop.f32.mrf.mxu0
    %v1465 = vadd.f32 %v164, %v1464
    %v1466 = vpop.f32.mrf.mxu0
    %1467 = vdwg.mxu0
    %1468 = vmatpush.bf16.msra.mxu0 %v752
    %1469 = vmatpush.bf16.msra.mxu0 %v748
    %1470 = vmatpush.bf16.msra.mxu0 %v744
    %1471 = vmatpush.bf16.msra.mxu0 %v740
    %1472 = vmatpush.bf16.msra.mxu0 %v736
    %1473 = vmatpush.bf16.msra.mxu0 %v732
    %1474 = vmatpush.bf16.msra.mxu0 %v728
    %1475 = vmatpush.bf16.msra.mxu0 %v724
    %1476 = vmatmul.bf16.gmra.mxu0 %v1428
    %v1477 = vpop.f32.mrf.mxu0
    %v1478 = vadd.f32 %v1465, %v1477
    %v1479 = vpop.f32.mrf.mxu0
    %1480 = vdwg.mxu0
    %1481 = vmatpush.bf16.msra.mxu0 %v721
    %1482 = vmatpush.bf16.msra.mxu0 %v717
    %1483 = vmatpush.bf16.msra.mxu0 %v713
    %1484 = vmatpush.bf16.msra.mxu0 %v709
    %1485 = vmatpush.bf16.msra.mxu0 %v705
    %1486 = vmatpush.bf16.msra.mxu0 %v701
    %1487 = vmatpush.bf16.msra.mxu0 %v697
    %1488 = vmatpush.bf16.msra.mxu0 %v693
    %1489 = vmatmul.bf16.gmra.mxu0 %v1427
    %v1490 = vpop.f32.mrf.mxu0
    %v1491 = vadd.f32 %v165, %v1490
    %v1492 = vpop.f32.mrf.mxu0
    %1493 = vdwg.mxu0
    %1494 = vmatpush.bf16.msra.mxu0 %v753
    %1495 = vmatpush.bf16.msra.mxu0 %v749
    %1496 = vmatpush.bf16.msra.mxu0 %v745
    %1497 = vmatpush.bf16.msra.mxu0 %v741
    %1498 = vmatpush.bf16.msra.mxu0 %v737
    %1499 = vmatpush.bf16.msra.mxu0 %v733
    %1500 = vmatpush.bf16.msra.mxu0 %v729
    %1501 = vmatpush.bf16.msra.mxu0 %v725
    %1502 = vmatmul.bf16.gmra.mxu0 %v1428
    %v1503 = vpop.f32.mrf.mxu0
    %v1504 = vadd.f32 %v1491, %v1503
    %v1505 = vpop.f32.mrf.mxu0
    %1506 = vdwg.mxu0
    %1507 = vmatpush.bf16.msra.mxu0 %v722
    %1508 = vmatpush.bf16.msra.mxu0 %v718
    %1509 = vmatpush.bf16.msra.mxu0 %v714
    %1510 = vmatpush.bf16.msra.mxu0 %v710
    %1511 = vmatpush.bf16.msra.mxu0 %v706
    %1512 = vmatpush.bf16.msra.mxu0 %v702
    %1513 = vmatpush.bf16.msra.mxu0 %v698
    %1514 = vmatpush.bf16.msra.mxu0 %v694
    %1515 = vmatmul.bf16.gmra.mxu0 %v1427
    %v1516 = vpop.f32.mrf.mxu0
    %v1517 = vadd.f32 %v166, %v1516
    %v1518 = vpop.f32.mrf.mxu0
    %1519 = vdwg.mxu0
    %1520 = vmatpush.bf16.msra.mxu0 %v754
    %1521 = vmatpush.bf16.msra.mxu0 %v750
    %1522 = vmatpush.bf16.msra.mxu0 %v746
    %1523 = vmatpush.bf16.msra.mxu0 %v742
    %1524 = vmatpush.bf16.msra.mxu0 %v738
    %1525 = vmatpush.bf16.msra.mxu0 %v734
    %1526 = vmatpush.bf16.msra.mxu0 %v730
    %1527 = vmatpush.bf16.msra.mxu0 %v726
    %1528 = vmatmul.bf16.gmra.mxu0 %v1428
    %v1529 = vpop.f32.mrf.mxu0
    %v1530 = vadd.f32 %v1517, %v1529
    %v1531 = vpop.f32.mrf.mxu0
    %1532 = vdwg.mxu0
    %v1533 = vmul.f32 %v1452, 0.5
    %v1534 = vmul.f32 %v1478, 0.5
    %v1535 = vmul.f32 %v1504, 0.5
    %v1536 = vtanh.pop %v1533
    %v1537 = vtanh.pop %v1534
    %v1538 = vtanh.pop %v1535
    %v1539 = vadd.f32 %v1536, 1.0
    %v1540 = vadd.f32 %v1537, 1.0
    %v1541 = vadd.f32 %v1538, 1.0
    %v1542 = vmul.f32 %v1539, 0.5
    %v1543 = vmul.f32 %v1540, 0.5
    %v1544 = vmul.f32 %v1541, 0.5
    %v1545 = vtanh.pop %v1530
    %v1546 = vmul.f32 %v1543, %v1346
    %v1547 = vmul.f32 %v1542, %v1545
    %v1548 = vadd.f32 %v1546, %v1547
    %v1549 = vtanh.pop %v1548
    %v1550 = vmul.f32 %v1544, %v1549
    %1551 = vmatpush.bf16.msra.mxu0 %v327
    %1552 = vmatpush.bf16.msra.mxu0 %v323
    %1553 = vmatpush.bf16.msra.mxu0 %v319
    %1554 = vmatpush.bf16.msra.mxu0 %v315
    %1555 = vmatpush.bf16.msra.mxu0 %v311
    %1556 = vmatpush.bf16.msra.mxu0 %v307
    %1557 = vmatpush.bf16.msra.mxu0 %v303
    %1558 = vmatpush.bf16.msra.mxu0 %v299
    %1559 = vmatmul.bf16.gmra.mxu0 %v1427
    %v1560 = vpop.f32.mrf.mxu0
    %v1561 = vadd.f32 %v117, %v1560
    %v1562 = vpop.f32.mrf.mxu0
    %1563 = vdwg.mxu0
    %1564 = vmatpush.bf16.msra.mxu0 %v328
    %1565 = vmatpush.bf16.msra.mxu0 %v324
    %1566 = vmatpush.bf16.msra.mxu0 %v320
    %1567 = vmatpush.bf16.msra.mxu0 %v316
    %1568 = vmatpush.bf16.msra.mxu0 %v312
    %1569 = vmatpush.bf16.msra.mxu0 %v308
    %1570 = vmatpush.bf16.msra.mxu0 %v304
    %1571 = vmatpush.bf16.msra.mxu0 %v300
    %1572 = vmatmul.bf16.gmra.mxu0 %v1427
    %v1573 = vpop.f32.mrf.mxu0
    %v1574 = vadd.f32 %v131, %v1573
    %v1575 = vpop.f32.mrf.mxu0
    %1576 = vdwg.mxu0
    %1577 = vmatpush.bf16.msra.mxu0 %v329
    %1578 = vmatpush.bf16.msra.mxu0 %v325
    %1579 = vmatpush.bf16.msra.mxu0 %v321
    %1580 = vmatpush.bf16.msra.mxu0 %v317
    %1581 = vmatpush.bf16.msra.mxu0 %v313
    %1582 = vmatpush.bf16.msra.mxu0 %v309
    %1583 = vmatpush.bf16.msra.mxu0 %v305
    %1584 = vmatpush.bf16.msra.mxu0 %v301
    %1585 = vmatmul.bf16.gmra.mxu0 %v1427
    %v1586 = vpop.f32.mrf.mxu0
    %v1587 = vadd.f32 %v145, %v1586
    %v1588 = vpop.f32.mrf.mxu0
    %1589 = vdwg.mxu0
    %1590 = vmatpush.bf16.msra.mxu0 %v330
    %1591 = vmatpush.bf16.msra.mxu0 %v326
    %1592 = vmatpush.bf16.msra.mxu0 %v322
    %1593 = vmatpush.bf16.msra.mxu0 %v318
    %1594 = vmatpush.bf16.msra.mxu0 %v314
    %1595 = vmatpush.bf16.msra.mxu0 %v310
    %1596 = vmatpush.bf16.msra.mxu0 %v306
    %1597 = vmatpush.bf16.msra.mxu0 %v302
    %1598 = vmatmul.bf16.gmra.mxu0 %v1427
    %v1599 = vpop.f32.mrf.mxu0
    %v1600 = vadd.f32 %v159, %v1599
    %v1601 = vpop.f32.mrf.mxu0
    %1602 = vdwg.mxu0
    %v1603 = vmul.f32 %v1561, 0.5
    %v1604 = vmul.f32 %v1574, 0.5
    %v1605 = vmul.f32 %v1587, 0.5
    %v1606 = vtanh.pop %v1603
    %v1607 = vtanh.pop %v1604
    %v1608 = vtanh.pop %v1605
    %v1609 = vadd.f32 %v1606, 1.0
    %v1610 = vadd.f32 %v1607, 1.0
    %v1611 = vadd.f32 %v1608, 1.0
    %v1612 = vmul.f32 %v1609, 0.5
    %v1613 = vmul.f32 %v1610, 0.5
    %v1614 = vmul.f32 %v1611, 0.5
    %v1615 = vtanh.pop %v1600
    %v1616 = vmul.f32 %v1613, %v1424
    %v1617 = vmul.f32 %v1612, %v1615
    %v1618 = vadd.f32 %v1616, %v1617
    %v1619 = vtanh.pop %v1618
    %v1620 = vmul.f32 %v1614, %v1619
    %v1621 = vpack.c.bf16 %v1620, %v1620
    %v1622 = vpack.c.bf16 %v1550, %v1550
    %1623 = vmatpush.bf16.msra.mxu0 %v719
    %1624 = vmatpush.bf16.msra.mxu0 %v715
    %1625 = vmatpush.bf16.msra.mxu0 %v711
    %1626 = vmatpush.bf16.msra.mxu0 %v707
    %1627 = vmatpush.bf16.msra.mxu0 %v703
    %1628 = vmatpush.bf16.msra.mxu0 %v699
    %1629 = vmatpush.bf16.msra.mxu0 %v695
    %1630 = vmatpush.bf16.msra.mxu0 %v691
    %1631 = vmatmul.bf16.gmra.mxu0 %v1621
    %v1632 = vpop.f32.mrf.mxu0
    %v1633 = vadd.f32 %v163, %v1632
    %v1634 = vpop.f32.mrf.mxu0
    %1635 = vdwg.mxu0
    %1636 = vmatpush.bf16.msra.mxu0 %v751
    %1637 = vmatpush.bf16.msra.mxu0 %v747
    %1638 = vmatpush.bf16.msra.mxu0 %v743
    %1639 = vmatpush.bf16.msra.mxu0 %v739
    %1640 = vmatpush.bf16.msra.mxu0 %v735
    %1641 = vmatpush.bf16.msra.mxu0 %v731
    %1642 = vmatpush.bf16.msra.mxu0 %v727
    %1643 = vmatpush.bf16.msra.mxu0 %v723
    %1644 = vmatmul.bf16.gmra.mxu0 %v1622
    %v1645 = vpop.f32.mrf.mxu0
    %v1646 = vadd.f32 %v1633, %v1645
    %v1647 = vpop.f32.mrf.mxu0
    %1648 = vdwg.mxu0
    %1649 = vmatpush.bf16.msra.mxu0 %v720
    %1650 = vmatpush.bf16.msra.mxu0 %v716
    %1651 = vmatpush.bf16.msra.mxu0 %v712
    %1652 = vmatpush.bf16.msra.mxu0 %v708
    %1653 = vmatpush.bf16.msra.mxu0 %v704
    %1654 = vmatpush.bf16.msra.mxu0 %v700
    %1655 = vmatpush.bf16.msra.mxu0 %v696
    %1656 = vmatpush.bf16.msra.mxu0 %v692
    %1657 = vmatmul.bf16.gmra.mxu0 %v1621
    %v1658 = vpop.f32.mrf.mxu0
    %v1659 = vadd.f32 %v164, %v1658
    %v1660 = vpop.f32.mrf.mxu0
    %1661 = vdwg.mxu0
    %1662 = vmatpush.bf16.msra.mxu0 %v752
    %1663 = vmatpush.bf16.msra.mxu0 %v748
    %1664 = vmatpush.bf16.msra.mxu0 %v744
    %1665 = vmatpush.bf16.msra.mxu0 %v740
    %1666 = vmatpush.bf16.msra.mxu0 %v736
    %1667 = vmatpush.bf16.msra.mxu0 %v732
    %1668 = vmatpush.bf16.msra.mxu0 %v728
    %1669 = vmatpush.bf16.msra.mxu0 %v724
    %1670 = vmatmul.bf16.gmra.mxu0 %v1622
    %v1671 = vpop.f32.mrf.mxu0
    %v1672 = vadd.f32 %v1659, %v1671
    %v1673 = vpop.f32.mrf.mxu0
    %1674 = vdwg.mxu0
    %1675 = vmatpush.bf16.msra.mxu0 %v721
    %1676 = vmatpush.bf16.msra.mxu0 %v717
    %1677 = vmatpush.bf16.msra.mxu0 %v713
    %1678 = vmatpush.bf16.msra.mxu0 %v709
    %1679 = vmatpush.bf16.msra.mxu0 %v705
    %1680 = vmatpush.bf16.msra.mxu0 %v701
    %1681 = vmatpush.bf16.msra.mxu0 %v697
    %1682 = vmatpush.bf16.msra.mxu0 %v693
    %1683 = vmatmul.bf16.gmra.mxu0 %v1621
    %v1684 = vpop.f32.mrf.mxu0
    %v1685 = vadd.f32 %v165, %v1684
    %v1686 = vpop.f32.mrf.mxu0
    %1687 = vdwg.mxu0
    %1688 = vmatpush.bf16.msra.mxu0 %v753
    %1689 = vmatpush.bf16.msra.mxu0 %v749
    %1690 = vmatpush.bf16.msra.mxu0 %v745
    %1691 = vmatpush.bf16.msra.mxu0 %v741
    %1692 = vmatpush.bf16.msra.mxu0 %v737
    %1693 = vmatpush.bf16.msra.mxu0 %v733
    %1694 = vmatpush.bf16.msra.mxu0 %v729
    %1695 = vmatpush.bf16.msra.mxu0 %v725
    %1696 = vmatmul.bf16.gmra.mxu0 %v1622
    %v1697 = vpop.f32.mrf.mxu0
    %v1698 = vadd.f32 %v1685, %v1697
    %v1699 = vpop.f32.mrf.mxu0
    %1700 = vdwg.mxu0
    %1701 = vmatpush.bf16.msra.mxu0 %v722
    %1702 = vmatpush.bf16.msra.mxu0 %v718
    %1703 = vmatpush.bf16.msra.mxu0 %v714
    %1704 = vmatpush.bf16.msra.mxu0 %v710
    %1705 = vmatpush.bf16.msra.mxu0 %v706
    %1706 = vmatpush.bf16.msra.mxu0 %v702
    %1707 = vmatpush.bf16.msra.mxu0 %v698
    %1708 = vmatpush.bf16.msra.mxu0 %v694
    %1709 = vmatmul.bf16.gmra.mxu0 %v1621
    %v1710 = vpop.f32.mrf.mxu0
    %v1711 = vadd.f32 %v166, %v1710
    %v1712 = vpop.f32.mrf.mxu0
    %1713 = vdwg.mxu0
    %1714 = vmatpush.bf16.msra.mxu0 %v754
    %1715 = vmatpush.bf16.msra.mxu0 %v750
    %1716 = vmatpush.bf16.msra.mxu0 %v746
    %1717 = vmatpush.bf16.msra.mxu0 %v742
    %1718 = vmatpush.bf16.msra.mxu0 %v738
    %1719 = vmatpush.bf16.msra.mxu0 %v734
    %1720 = vmatpush.bf16.msra.mxu0 %v730
    %1721 = vmatpush.bf16.msra.mxu0 %v726
    %1722 = vmatmul.bf16.gmra.mxu0 %v1622
    %v1723 = vpop.f32.mrf.mxu0
    %v1724 = vadd.f32 %v1711, %v1723
    %v1725 = vpop.f32.mrf.mxu0
    %1726 = vdwg.mxu0
    %v1727 = vmul.f32 %v1646, 0.5
    %v1728 = vmul.f32 %v1672, 0.5
    %v1729 = vmul.f32 %v1698, 0.5
    %v1730 = vtanh.pop %v1727
    %v1731 = vtanh.pop %v1728
    %v1732 = vtanh.pop %v1729
    %v1733 = vadd.f32 %v1730, 1.0
    %v1734 = vadd.f32 %v1731, 1.0
    %v1735 = vadd.f32 %v1732, 1.0
    %v1736 = vmul.f32 %v1733, 0.5
    %v1737 = vmul.f32 %v1734, 0.5
    %v1738 = vmul.f32 %v1735, 0.5
    %v1739 = vtanh.pop %v1724
    %v1740 = vmul.f32 %v1737, %v1548
    %v1741 = vmul.f32 %v1736, %v1739
    %v1742 = vadd.f32 %v1740, %v1741
    %v1743 = vtanh.pop %v1742
    %v1744 = vmul.f32 %v1738, %v1743
    %v1749 = vrot.slane %v117, 2
    %v1750 = vrot.slane %v131, 2
    %v1751 = vrot.slane %v145, 2
    %v1752 = vrot.slane %v159, 2
    %1757 = vmatpush.bf16.msra.mxu0 %v327
    %1758 = vmatpush.bf16.msra.mxu0 %v323
    %1759 = vmatpush.bf16.msra.mxu0 %v319
    %1760 = vmatpush.bf16.msra.mxu0 %v315
    %1761 = vmatpush.bf16.msra.mxu0 %v311
    %1762 = vmatpush.bf16.msra.mxu0 %v307
    %1763 = vmatpush.bf16.msra.mxu0 %v303
    %1764 = vmatpush.bf16.msra.mxu0 %v299
    %1765 = vmatmul.bf16.gmra.mxu0 %v1621
    %v1766 = vpop.f32.mrf.mxu0
    %v1767 = vadd.f32 %v1749, %v1766
    %v1768 = vpop.f32.mrf.mxu0
    %1769 = vdwg.mxu0
    %1770 = vmatpush.bf16.msra.mxu0 %v328
    %1771 = vmatpush.bf16.msra.mxu0 %v324
    %1772 = vmatpush.bf16.msra.mxu0 %v320
    %1773 = vmatpush.bf16.msra.mxu0 %v316
    %1774 = vmatpush.bf16.msra.mxu0 %v312
    %1775 = vmatpush.bf16.msra.mxu0 %v308
    %1776 = vmatpush.bf16.msra.mxu0 %v304
    %1777 = vmatpush.bf16.msra.mxu0 %v300
    %1778 = vmatmul.bf16.gmra.mxu0 %v1621
    %v1779 = vpop.f32.mrf.mxu0
    %v1780 = vadd.f32 %v1750, %v1779
    %v1781 = vpop.f32.mrf.mxu0
    %1782 = vdwg.mxu0
    %1783 = vmatpush.bf16.msra.mxu0 %v329
    %1784 = vmatpush.bf16.msra.mxu0 %v325
    %1785 = vmatpush.bf16.msra.mxu0 %v321
    %1786 = vmatpush.bf16.msra.mxu0 %v317
    %1787 = vmatpush.bf16.msra.mxu0 %v313
    %1788 = vmatpush.bf16.msra.mxu0 %v309
    %1789 = vmatpush.bf16.msra.mxu0 %v305
    %1790 = vmatpush.bf16.msra.mxu0 %v301
    %1791 = vmatmul.bf16.gmra.mxu0 %v1621
    %v1792 = vpop.f32.mrf.mxu0
    %v1793 = vadd.f32 %v1751, %v1792
    %v1794 = vpop.f32.mrf.mxu0
    %1795 = vdwg.mxu0
    %1796 = vmatpush.bf16.msra.mxu0 %v330
    %1797 = vmatpush.bf16.msra.mxu0 %v326
    %1798 = vmatpush.bf16.msra.mxu0 %v322
    %1799 = vmatpush.bf16.msra.mxu0 %v318
    %1800 = vmatpush.bf16.msra.mxu0 %v314
    %1801 = vmatpush.bf16.msra.mxu0 %v310
    %1802 = vmatpush.bf16.msra.mxu0 %v306
    %1803 = vmatpush.bf16.msra.mxu0 %v302
    %1804 = vmatmul.bf16.gmra.mxu0 %v1621
    %v1805 = vpop.f32.mrf.mxu0
    %v1806 = vadd.f32 %v1752, %v1805
    %v1807 = vpop.f32.mrf.mxu0
    %1808 = vdwg.mxu0
    %v1809 = vmul.f32 %v1767, 0.5
    %v1810 = vmul.f32 %v1780, 0.5
    %v1811 = vmul.f32 %v1793, 0.5
    %v1812 = vtanh.pop %v1809
    %v1813 = vtanh.pop %v1810
    %v1814 = vtanh.pop %v1811
    %v1815 = vadd.f32 %v1812, 1.0
    %v1816 = vadd.f32 %v1813, 1.0
    %v1817 = vadd.f32 %v1814, 1.0
    %v1818 = vmul.f32 %v1815, 0.5
    %v1819 = vmul.f32 %v1816, 0.5
    %v1820 = vmul.f32 %v1817, 0.5
    %v1821 = vtanh.pop %v1806
    %v1822 = vmul.f32 %v1819, %v1618
    %v1823 = vmul.f32 %v1818, %v1821
    %v1824 = vadd.f32 %v1822, %v1823
    %v1825 = vtanh.pop %v1824
    %v1826 = vmul.f32 %v1820, %v1825
    %v1827 = vpack.c.bf16 %v1826, %v1826
    %v1828 = vpack.c.bf16 %v1744, %v1744
    %1829 = vmatpush.bf16.msra.mxu0 %v719
    %1830 = vmatpush.bf16.msra.mxu0 %v715
    %1831 = vmatpush.bf16.msra.mxu0 %v711
    %1832 = vmatpush.bf16.msra.mxu0 %v707
    %1833 = vmatpush.bf16.msra.mxu0 %v703
    %1834 = vmatpush.bf16.msra.mxu0 %v699
    %1835 = vmatpush.bf16.msra.mxu0 %v695
    %1836 = vmatpush.bf16.msra.mxu0 %v691
    %1837 = vmatmul.bf16.gmra.mxu0 %v1827
    %v1838 = vpop.f32.mrf.mxu0
    %v1839 = vadd.f32 %v163, %v1838
    %v1840 = vpop.f32.mrf.mxu0
    %1841 = vdwg.mxu0
    %1842 = vmatpush.bf16.msra.mxu0 %v751
    %1843 = vmatpush.bf16.msra.mxu0 %v747
    %1844 = vmatpush.bf16.msra.mxu0 %v743
    %1845 = vmatpush.bf16.msra.mxu0 %v739
    %1846 = vmatpush.bf16.msra.mxu0 %v735
    %1847 = vmatpush.bf16.msra.mxu0 %v731
    %1848 = vmatpush.bf16.msra.mxu0 %v727
    %1849 = vmatpush.bf16.msra.mxu0 %v723
    %1850 = vmatmul.bf16.gmra.mxu0 %v1828
    %v1851 = vpop.f32.mrf.mxu0
    %v1852 = vadd.f32 %v1839, %v1851
    %v1853 = vpop.f32.mrf.mxu0
    %1854 = vdwg.mxu0
    %1855 = vmatpush.bf16.msra.mxu0 %v720
    %1856 = vmatpush.bf16.msra.mxu0 %v716
    %1857 = vmatpush.bf16.msra.mxu0 %v712
    %1858 = vmatpush.bf16.msra.mxu0 %v708
    %1859 = vmatpush.bf16.msra.mxu0 %v704
    %1860 = vmatpush.bf16.msra.mxu0 %v700
    %1861 = vmatpush.bf16.msra.mxu0 %v696
    %1862 = vmatpush.bf16.msra.mxu0 %v692
    %1863 = vmatmul.bf16.gmra.mxu0 %v1827
    %v1864 = vpop.f32.mrf.mxu0
    %v1865 = vadd.f32 %v164, %v1864
    %v1866 = vpop.f32.mrf.mxu0
    %1867 = vdwg.mxu0
    %1868 = vmatpush.bf16.msra.mxu0 %v752
    %1869 = vmatpush.bf16.msra.mxu0 %v748
    %1870 = vmatpush.bf16.msra.mxu0 %v744
    %1871 = vmatpush.bf16.msra.mxu0 %v740
    %1872 = vmatpush.bf16.msra.mxu0 %v736
    %1873 = vmatpush.bf16.msra.mxu0 %v732
    %1874 = vmatpush.bf16.msra.mxu0 %v728
    %1875 = vmatpush.bf16.msra.mxu0 %v724
    %1876 = vmatmul.bf16.gmra.mxu0 %v1828
    %v1877 = vpop.f32.mrf.mxu0
    %v1878 = vadd.f32 %v1865, %v1877
    %v1879 = vpop.f32.mrf.mxu0
    %1880 = vdwg.mxu0
    %1881 = vmatpush.bf16.msra.mxu0 %v721
    %1882 = vmatpush.bf16.msra.mxu0 %v717
    %1883 = vmatpush.bf16.msra.mxu0 %v713
    %1884 = vmatpush.bf16.msra.mxu0 %v709
    %1885 = vmatpush.bf16.msra.mxu0 %v705
    %1886 = vmatpush.bf16.msra.mxu0 %v701
    %1887 = vmatpush.bf16.msra.mxu0 %v697
    %1888 = vmatpush.bf16.msra.mxu0 %v693
    %1889 = vmatmul.bf16.gmra.mxu0 %v1827
    %v1890 = vpop.f32.mrf.mxu0
    %v1891 = vadd.f32 %v165, %v1890
    %v1892 = vpop.f32.mrf.mxu0
    %1893 = vdwg.mxu0
    %1894 = vmatpush.bf16.msra.mxu0 %v753
    %1895 = vmatpush.bf16.msra.mxu0 %v749
    %1896 = vmatpush.bf16.msra.mxu0 %v745
    %1897 = vmatpush.bf16.msra.mxu0 %v741
    %1898 = vmatpush.bf16.msra.mxu0 %v737
    %1899 = vmatpush.bf16.msra.mxu0 %v733
    %1900 = vmatpush.bf16.msra.mxu0 %v729
    %1901 = vmatpush.bf16.msra.mxu0 %v725
    %1902 = vmatmul.bf16.gmra.mxu0 %v1828
    %v1903 = vpop.f32.mrf.mxu0
    %v1904 = vadd.f32 %v1891, %v1903
    %v1905 = vpop.f32.mrf.mxu0
    %1906 = vdwg.mxu0
    %1907 = vmatpush.bf16.msra.mxu0 %v722
    %1908 = vmatpush.bf16.msra.mxu0 %v718
    %1909 = vmatpush.bf16.msra.mxu0 %v714
    %1910 = vmatpush.bf16.msra.mxu0 %v710
    %1911 = vmatpush.bf16.msra.mxu0 %v706
    %1912 = vmatpush.bf16.msra.mxu0 %v702
    %1913 = vmatpush.bf16.msra.mxu0 %v698
    %1914 = vmatpush.bf16.msra.mxu0 %v694
    %1915 = vmatmul.bf16.gmra.mxu0 %v1827
    %v1916 = vpop.f32.mrf.mxu0
    %v1917 = vadd.f32 %v166, %v1916
    %v1918 = vpop.f32.mrf.mxu0
    %1919 = vdwg.mxu0
    %1920 = vmatpush.bf16.msra.mxu0 %v754
    %1921 = vmatpush.bf16.msra.mxu0 %v750
    %1922 = vmatpush.bf16.msra.mxu0 %v746
    %1923 = vmatpush.bf16.msra.mxu0 %v742
    %1924 = vmatpush.bf16.msra.mxu0 %v738
    %1925 = vmatpush.bf16.msra.mxu0 %v734
    %1926 = vmatpush.bf16.msra.mxu0 %v730
    %1927 = vmatpush.bf16.msra.mxu0 %v726
    %1928 = vmatmul.bf16.gmra.mxu0 %v1828
    %v1929 = vpop.f32.mrf.mxu0
    %v1930 = vadd.f32 %v1917, %v1929
    %v1931 = vpop.f32.mrf.mxu0
    %1932 = vdwg.mxu0
    %v1933 = vmul.f32 %v1852, 0.5
    %v1934 = vmul.f32 %v1878, 0.5
    %v1935 = vmul.f32 %v1904, 0.5
    %v1936 = vtanh.pop %v1933
    %v1937 = vtanh.pop %v1934
    %v1938 = vtanh.pop %v1935
    %v1939 = vadd.f32 %v1936, 1.0
    %v1940 = vadd.f32 %v1937, 1.0
    %v1941 = vadd.f32 %v1938, 1.0
    %v1942 = vmul.f32 %v1939, 0.5
    %v1943 = vmul.f32 %v1940, 0.5
    %v1944 = vmul.f32 %v1941, 0.5
    %v1945 = vtanh.pop %v1930
    %v1946 = vmul.f32 %v1943, %v1742
    %v1947 = vmul.f32 %v1942, %v1945
    %v1948 = vadd.f32 %v1946, %v1947
    %v1949 = vtanh.pop %v1948
    %v1950 = vmul.f32 %v1944, %v1949
    %v1951 = vrot.slane %v117, 4
    %v1952 = vrot.slane %v131, 4
    %v1953 = vrot.slane %v145, 4
    %v1954 = vrot.slane %v159, 4
    %1959 = vmatpush.bf16.msra.mxu0 %v327
    %1960 = vmatpush.bf16.msra.mxu0 %v323
    %1961 = vmatpush.bf16.msra.mxu0 %v319
    %1962 = vmatpush.bf16.msra.mxu0 %v315
    %1963 = vmatpush.bf16.msra.mxu0 %v311
    %1964 = vmatpush.bf16.msra.mxu0 %v307
    %1965 = vmatpush.bf16.msra.mxu0 %v303
    %1966 = vmatpush.bf16.msra.mxu0 %v299
    %1967 = vmatmul.bf16.gmra.mxu0 %v1827
    %v1968 = vpop.f32.mrf.mxu0
    %v1969 = vadd.f32 %v1951, %v1968
    %v1970 = vpop.f32.mrf.mxu0
    %1971 = vdwg.mxu0
    %1972 = vmatpush.bf16.msra.mxu0 %v328
    %1973 = vmatpush.bf16.msra.mxu0 %v324
    %1974 = vmatpush.bf16.msra.mxu0 %v320
    %1975 = vmatpush.bf16.msra.mxu0 %v316
    %1976 = vmatpush.bf16.msra.mxu0 %v312
    %1977 = vmatpush.bf16.msra.mxu0 %v308
    %1978 = vmatpush.bf16.msra.mxu0 %v304
    %1979 = vmatpush.bf16.msra.mxu0 %v300
    %1980 = vmatmul.bf16.gmra.mxu0 %v1827
    %v1981 = vpop.f32.mrf.mxu0
    %v1982 = vadd.f32 %v1952, %v1981
    %v1983 = vpop.f32.mrf.mxu0
    %1984 = vdwg.mxu0
    %1985 = vmatpush.bf16.msra.mxu0 %v329
    %1986 = vmatpush.bf16.msra.mxu0 %v325
    %1987 = vmatpush.bf16.msra.mxu0 %v321
    %1988 = vmatpush.bf16.msra.mxu0 %v317
    %1989 = vmatpush.bf16.msra.mxu0 %v313
    %1990 = vmatpush.bf16.msra.mxu0 %v309
    %1991 = vmatpush.bf16.msra.mxu0 %v305
    %1992 = vmatpush.bf16.msra.mxu0 %v301
    %1993 = vmatmul.bf16.gmra.mxu0 %v1827
    %v1994 = vpop.f32.mrf.mxu0
    %v1995 = vadd.f32 %v1953, %v1994
    %v1996 = vpop.f32.mrf.mxu0
    %1997 = vdwg.mxu0
    %1998 = vmatpush.bf16.msra.mxu0 %v330
    %1999 = vmatpush.bf16.msra.mxu0 %v326
    %2000 = vmatpush.bf16.msra.mxu0 %v322
    %2001 = vmatpush.bf16.msra.mxu0 %v318
    %2002 = vmatpush.bf16.msra.mxu0 %v314
    %2003 = vmatpush.bf16.msra.mxu0 %v310
    %2004 = vmatpush.bf16.msra.mxu0 %v306
    %2005 = vmatpush.bf16.msra.mxu0 %v302
    %2006 = vmatmul.bf16.gmra.mxu0 %v1827
    %v2007 = vpop.f32.mrf.mxu0
    %v2008 = vadd.f32 %v1954, %v2007
    %v2009 = vpop.f32.mrf.mxu0
    %2010 = vdwg.mxu0
    %v2011 = vmul.f32 %v1969, 0.5
    %v2012 = vmul.f32 %v1982, 0.5
    %v2013 = vmul.f32 %v1995, 0.5
    %v2014 = vtanh.pop %v2011
    %v2015 = vtanh.pop %v2012
    %v2016 = vtanh.pop %v2013
    %v2017 = vadd.f32 %v2014, 1.0
    %v2018 = vadd.f32 %v2015, 1.0
    %v2019 = vadd.f32 %v2016, 1.0
    %v2020 = vmul.f32 %v2017, 0.5
    %v2021 = vmul.f32 %v2018, 0.5
    %v2022 = vmul.f32 %v2019, 0.5
    %v2023 = vtanh.pop %v2008
    %v2024 = vmul.f32 %v2021, %v1824
    %v2025 = vmul.f32 %v2020, %v2023
    %v2026 = vadd.f32 %v2024, %v2025
    %v2027 = vtanh.pop %v2026
    %v2028 = vmul.f32 %v2022, %v2027
    %v2029 = vpack.c.bf16 %v2028, %v2028
    %v2030 = vpack.c.bf16 %v1950, %v1950
    %2031 = vmatpush.bf16.msra.mxu0 %v719
    %2032 = vmatpush.bf16.msra.mxu0 %v715
    %2033 = vmatpush.bf16.msra.mxu0 %v711
    %2034 = vmatpush.bf16.msra.mxu0 %v707
    %2035 = vmatpush.bf16.msra.mxu0 %v703
    %2036 = vmatpush.bf16.msra.mxu0 %v699
    %2037 = vmatpush.bf16.msra.mxu0 %v695
    %2038 = vmatpush.bf16.msra.mxu0 %v691
    %2039 = vmatmul.bf16.gmra.mxu0 %v2029
    %v2040 = vpop.f32.mrf.mxu0
    %v2041 = vadd.f32 %v163, %v2040
    %v2042 = vpop.f32.mrf.mxu0
    %2043 = vdwg.mxu0
    %2044 = vmatpush.bf16.msra.mxu0 %v751
    %2045 = vmatpush.bf16.msra.mxu0 %v747
    %2046 = vmatpush.bf16.msra.mxu0 %v743
    %2047 = vmatpush.bf16.msra.mxu0 %v739
    %2048 = vmatpush.bf16.msra.mxu0 %v735
    %2049 = vmatpush.bf16.msra.mxu0 %v731
    %2050 = vmatpush.bf16.msra.mxu0 %v727
    %2051 = vmatpush.bf16.msra.mxu0 %v723
    %2052 = vmatmul.bf16.gmra.mxu0 %v2030
    %v2053 = vpop.f32.mrf.mxu0
    %v2054 = vadd.f32 %v2041, %v2053
    %v2055 = vpop.f32.mrf.mxu0
    %2056 = vdwg.mxu0
    %2057 = vmatpush.bf16.msra.mxu0 %v720
    %2058 = vmatpush.bf16.msra.mxu0 %v716
    %2059 = vmatpush.bf16.msra.mxu0 %v712
    %2060 = vmatpush.bf16.msra.mxu0 %v708
    %2061 = vmatpush.bf16.msra.mxu0 %v704
    %2062 = vmatpush.bf16.msra.mxu0 %v700
    %2063 = vmatpush.bf16.msra.mxu0 %v696
    %2064 = vmatpush.bf16.msra.mxu0 %v692
    %2065 = vmatmul.bf16.gmra.mxu0 %v2029
    %v2066 = vpop.f32.mrf.mxu0
    %v2067 = vadd.f32 %v164, %v2066
    %v2068 = vpop.f32.mrf.mxu0
    %2069 = vdwg.mxu0
    %2070 = vmatpush.bf16.msra.mxu0 %v752
    %2071 = vmatpush.bf16.msra.mxu0 %v748
    %2072 = vmatpush.bf16.msra.mxu0 %v744
    %2073 = vmatpush.bf16.msra.mxu0 %v740
    %2074 = vmatpush.bf16.msra.mxu0 %v736
    %2075 = vmatpush.bf16.msra.mxu0 %v732
    %2076 = vmatpush.bf16.msra.mxu0 %v728
    %2077 = vmatpush.bf16.msra.mxu0 %v724
    %2078 = vmatmul.bf16.gmra.mxu0 %v2030
    %v2079 = vpop.f32.mrf.mxu0
    %v2080 = vadd.f32 %v2067, %v2079
    %v2081 = vpop.f32.mrf.mxu0
    %2082 = vdwg.mxu0
    %2083 = vmatpush.bf16.msra.mxu0 %v721
    %2084 = vmatpush.bf16.msra.mxu0 %v717
    %2085 = vmatpush.bf16.msra.mxu0 %v713
    %2086 = vmatpush.bf16.msra.mxu0 %v709
    %2087 = vmatpush.bf16.msra.mxu0 %v705
    %2088 = vmatpush.bf16.msra.mxu0 %v701
    %2089 = vmatpush.bf16.msra.mxu0 %v697
    %2090 = vmatpush.bf16.msra.mxu0 %v693
    %2091 = vmatmul.bf16.gmra.mxu0 %v2029
    %v2092 = vpop.f32.mrf.mxu0
    %v2093 = vadd.f32 %v165, %v2092
    %v2094 = vpop.f32.mrf.mxu0
    %2095 = vdwg.mxu0
    %2096 = vmatpush.bf16.msra.mxu0 %v753
    %2097 = vmatpush.bf16.msra.mxu0 %v749
    %2098 = vmatpush.bf16.msra.mxu0 %v745
    %2099 = vmatpush.bf16.msra.mxu0 %v741
    %2100 = vmatpush.bf16.msra.mxu0 %v737
    %2101 = vmatpush.bf16.msra.mxu0 %v733
    %2102 = vmatpush.bf16.msra.mxu0 %v729
    %2103 = vmatpush.bf16.msra.mxu0 %v725
    %2104 = vmatmul.bf16.gmra.mxu0 %v2030
    %v2105 = vpop.f32.mrf.mxu0
    %v2106 = vadd.f32 %v2093, %v2105
    %v2107 = vpop.f32.mrf.mxu0
    %2108 = vdwg.mxu0
    %2109 = vmatpush.bf16.msra.mxu0 %v722
    %2110 = vmatpush.bf16.msra.mxu0 %v718
    %2111 = vmatpush.bf16.msra.mxu0 %v714
    %2112 = vmatpush.bf16.msra.mxu0 %v710
    %2113 = vmatpush.bf16.msra.mxu0 %v706
    %2114 = vmatpush.bf16.msra.mxu0 %v702
    %2115 = vmatpush.bf16.msra.mxu0 %v698
    %2116 = vmatpush.bf16.msra.mxu0 %v694
    %2117 = vmatmul.bf16.gmra.mxu0 %v2029
    %v2118 = vpop.f32.mrf.mxu0
    %v2119 = vadd.f32 %v166, %v2118
    %v2120 = vpop.f32.mrf.mxu0
    %2121 = vdwg.mxu0
    %2122 = vmatpush.bf16.msra.mxu0 %v754
    %2123 = vmatpush.bf16.msra.mxu0 %v750
    %2124 = vmatpush.bf16.msra.mxu0 %v746
    %2125 = vmatpush.bf16.msra.mxu0 %v742
    %2126 = vmatpush.bf16.msra.mxu0 %v738
    %2127 = vmatpush.bf16.msra.mxu0 %v734
    %2128 = vmatpush.bf16.msra.mxu0 %v730
    %2129 = vmatpush.bf16.msra.mxu0 %v726
    %2130 = vmatmul.bf16.gmra.mxu0 %v2030
    %v2131 = vpop.f32.mrf.mxu0
    %v2132 = vadd.f32 %v2119, %v2131
    %v2133 = vpop.f32.mrf.mxu0
    %2134 = vdwg.mxu0
    %v2135 = vmul.f32 %v2054, 0.5
    %v2136 = vmul.f32 %v2080, 0.5
    %v2137 = vmul.f32 %v2106, 0.5
    %v2138 = vtanh.pop %v2135
    %v2139 = vtanh.pop %v2136
    %v2140 = vtanh.pop %v2137
    %v2141 = vadd.f32 %v2138, 1.0
    %v2142 = vadd.f32 %v2139, 1.0
    %v2143 = vadd.f32 %v2140, 1.0
    %v2144 = vmul.f32 %v2141, 0.5
    %v2145 = vmul.f32 %v2142, 0.5
    %v2146 = vmul.f32 %v2143, 0.5
    %v2147 = vtanh.pop %v2132
    %v2148 = vmul.f32 %v2145, %v1948
    %v2149 = vmul.f32 %v2144, %v2147
    %v2150 = vadd.f32 %v2148, %v2149
    %v2151 = vtanh.pop %v2150
    %v2152 = vmul.f32 %v2146, %v2151
    %v2153 = vrot.slane %v117, 6
    %v2154 = vrot.slane %v131, 6
    %v2155 = vrot.slane %v145, 6
    %v2156 = vrot.slane %v159, 6
    %2161 = vmatpush.bf16.msra.mxu0 %v327
    %2162 = vmatpush.bf16.msra.mxu0 %v323
    %2163 = vmatpush.bf16.msra.mxu0 %v319
    %2164 = vmatpush.bf16.msra.mxu0 %v315
    %2165 = vmatpush.bf16.msra.mxu0 %v311
    %2166 = vmatpush.bf16.msra.mxu0 %v307
    %2167 = vmatpush.bf16.msra.mxu0 %v303
    %2168 = vmatpush.bf16.msra.mxu0 %v299
    %2169 = vmatmul.bf16.gmra.mxu0 %v2029
    %v2170 = vpop.f32.mrf.mxu0
    %v2171 = vadd.f32 %v2153, %v2170
    %v2172 = vpop.f32.mrf.mxu0
    %2173 = vdwg.mxu0
    %2174 = vmatpush.bf16.msra.mxu0 %v328
    %2175 = vmatpush.bf16.msra.mxu0 %v324
    %2176 = vmatpush.bf16.msra.mxu0 %v320
    %2177 = vmatpush.bf16.msra.mxu0 %v316
    %2178 = vmatpush.bf16.msra.mxu0 %v312
    %2179 = vmatpush.bf16.msra.mxu0 %v308
    %2180 = vmatpush.bf16.msra.mxu0 %v304
    %2181 = vmatpush.bf16.msra.mxu0 %v300
    %2182 = vmatmul.bf16.gmra.mxu0 %v2029
    %v2183 = vpop.f32.mrf.mxu0
    %v2184 = vadd.f32 %v2154, %v2183
    %v2185 = vpop.f32.mrf.mxu0
    %2186 = vdwg.mxu0
    %2187 = vmatpush.bf16.msra.mxu0 %v329
    %2188 = vmatpush.bf16.msra.mxu0 %v325
    %2189 = vmatpush.bf16.msra.mxu0 %v321
    %2190 = vmatpush.bf16.msra.mxu0 %v317
    %2191 = vmatpush.bf16.msra.mxu0 %v313
    %2192 = vmatpush.bf16.msra.mxu0 %v309
    %2193 = vmatpush.bf16.msra.mxu0 %v305
    %2194 = vmatpush.bf16.msra.mxu0 %v301
    %2195 = vmatmul.bf16.gmra.mxu0 %v2029
    %v2196 = vpop.f32.mrf.mxu0
    %v2197 = vadd.f32 %v2155, %v2196
    %v2198 = vpop.f32.mrf.mxu0
    %2199 = vdwg.mxu0
    %2200 = vmatpush.bf16.msra.mxu0 %v330
    %2201 = vmatpush.bf16.msra.mxu0 %v326
    %2202 = vmatpush.bf16.msra.mxu0 %v322
    %2203 = vmatpush.bf16.msra.mxu0 %v318
    %2204 = vmatpush.bf16.msra.mxu0 %v314
    %2205 = vmatpush.bf16.msra.mxu0 %v310
    %2206 = vmatpush.bf16.msra.mxu0 %v306
    %2207 = vmatpush.bf16.msra.mxu0 %v302
    %2208 = vmatmul.bf16.gmra.mxu0 %v2029
    %v2209 = vpop.f32.mrf.mxu0
    %v2210 = vadd.f32 %v2156, %v2209
    %v2211 = vpop.f32.mrf.mxu0
    %2212 = vdwg.mxu0
    %v2213 = vmul.f32 %v2171, 0.5
    %v2214 = vmul.f32 %v2184, 0.5
    %v2215 = vmul.f32 %v2197, 0.5
    %v2216 = vtanh.pop %v2213
    %v2217 = vtanh.pop %v2214
    %v2218 = vtanh.pop %v2215
    %v2219 = vadd.f32 %v2216, 1.0
    %v2220 = vadd.f32 %v2217, 1.0
    %v2221 = vadd.f32 %v2218, 1.0
    %v2222 = vmul.f32 %v2219, 0.5
    %v2223 = vmul.f32 %v2220, 0.5
    %v2224 = vmul.f32 %v2221, 0.5
    %v2225 = vtanh.pop %v2210
    %v2226 = vmul.f32 %v2223, %v2026
    %v2227 = vmul.f32 %v2222, %v2225
    %v2228 = vadd.f32 %v2226, %v2227
    %v2229 = vtanh.pop %v2228
    %v2230 = vmul.f32 %v2224, %v2229
    %v2231 = vpack.c.bf16 %v2230, %v2230
    %v2232 = vpack.c.bf16 %v2152, %v2152
    %2233 = vmatpush.bf16.msra.mxu0 %v719
    %2234 = vmatpush.bf16.msra.mxu0 %v715
    %2235 = vmatpush.bf16.msra.mxu0 %v711
    %2236 = vmatpush.bf16.msra.mxu0 %v707
    %2237 = vmatpush.bf16.msra.mxu0 %v703
    %2238 = vmatpush.bf16.msra.mxu0 %v699
    %2239 = vmatpush.bf16.msra.mxu0 %v695
    %2240 = vmatpush.bf16.msra.mxu0 %v691
    %2241 = vmatmul.bf16.gmra.mxu0 %v2231
    %v2242 = vpop.f32.mrf.mxu0
    %v2243 = vadd.f32 %v163, %v2242
    %v2244 = vpop.f32.mrf.mxu0
    %2245 = vdwg.mxu0
    %2246 = vmatpush.bf16.msra.mxu0 %v751
    %2247 = vmatpush.bf16.msra.mxu0 %v747
    %2248 = vmatpush.bf16.msra.mxu0 %v743
    %2249 = vmatpush.bf16.msra.mxu0 %v739
    %2250 = vmatpush.bf16.msra.mxu0 %v735
    %2251 = vmatpush.bf16.msra.mxu0 %v731
    %2252 = vmatpush.bf16.msra.mxu0 %v727
    %2253 = vmatpush.bf16.msra.mxu0 %v723
    %2254 = vmatmul.bf16.gmra.mxu0 %v2232
    %v2255 = vpop.f32.mrf.mxu0
    %v2256 = vadd.f32 %v2243, %v2255
    %v2257 = vpop.f32.mrf.mxu0
    %2258 = vdwg.mxu0
    %2259 = vmatpush.bf16.msra.mxu0 %v720
    %2260 = vmatpush.bf16.msra.mxu0 %v716
    %2261 = vmatpush.bf16.msra.mxu0 %v712
    %2262 = vmatpush.bf16.msra.mxu0 %v708
    %2263 = vmatpush.bf16.msra.mxu0 %v704
    %2264 = vmatpush.bf16.msra.mxu0 %v700
    %2265 = vmatpush.bf16.msra.mxu0 %v696
    %2266 = vmatpush.bf16.msra.mxu0 %v692
    %2267 = vmatmul.bf16.gmra.mxu0 %v2231
    %v2268 = vpop.f32.mrf.mxu0
    %v2269 = vadd.f32 %v164, %v2268
    %v2270 = vpop.f32.mrf.mxu0
    %2271 = vdwg.mxu0
    %2272 = vmatpush.bf16.msra.mxu0 %v752
    %2273 = vmatpush.bf16.msra.mxu0 %v748
    %2274 = vmatpush.bf16.msra.mxu0 %v744
    %2275 = vmatpush.bf16.msra.mxu0 %v740
    %2276 = vmatpush.bf16.msra.mxu0 %v736
    %2277 = vmatpush.bf16.msra.mxu0 %v732
    %2278 = vmatpush.bf16.msra.mxu0 %v728
    %2279 = vmatpush.bf16.msra.mxu0 %v724
    %2280 = vmatmul.bf16.gmra.mxu0 %v2232
    %v2281 = vpop.f32.mrf.mxu0
    %v2282 = vadd.f32 %v2269, %v2281
    %v2283 = vpop.f32.mrf.mxu0
    %2284 = vdwg.mxu0
    %2285 = vmatpush.bf16.msra.mxu0 %v721
    %2286 = vmatpush.bf16.msra.mxu0 %v717
    %2287 = vmatpush.bf16.msra.mxu0 %v713
    %2288 = vmatpush.bf16.msra.mxu0 %v709
    %2289 = vmatpush.bf16.msra.mxu0 %v705
    %2290 = vmatpush.bf16.msra.mxu0 %v701
    %2291 = vmatpush.bf16.msra.mxu0 %v697
    %2292 = vmatpush.bf16.msra.mxu0 %v693
    %2293 = vmatmul.bf16.gmra.mxu0 %v2231
    %v2294 = vpop.f32.mrf.mxu0
    %v2295 = vadd.f32 %v165, %v2294
    %v2296 = vpop.f32.mrf.mxu0
    %2297 = vdwg.mxu0
    %2298 = vmatpush.bf16.msra.mxu0 %v753
    %2299 = vmatpush.bf16.msra.mxu0 %v749
    %2300 = vmatpush.bf16.msra.mxu0 %v745
    %2301 = vmatpush.bf16.msra.mxu0 %v741
    %2302 = vmatpush.bf16.msra.mxu0 %v737
    %2303 = vmatpush.bf16.msra.mxu0 %v733
    %2304 = vmatpush.bf16.msra.mxu0 %v729
    %2305 = vmatpush.bf16.msra.mxu0 %v725
    %2306 = vmatmul.bf16.gmra.mxu0 %v2232
    %v2307 = vpop.f32.mrf.mxu0
    %v2308 = vadd.f32 %v2295, %v2307
    %v2309 = vpop.f32.mrf.mxu0
    %2310 = vdwg.mxu0
    %2311 = vmatpush.bf16.msra.mxu0 %v722
    %2312 = vmatpush.bf16.msra.mxu0 %v718
    %2313 = vmatpush.bf16.msra.mxu0 %v714
    %2314 = vmatpush.bf16.msra.mxu0 %v710
    %2315 = vmatpush.bf16.msra.mxu0 %v706
    %2316 = vmatpush.bf16.msra.mxu0 %v702
    %2317 = vmatpush.bf16.msra.mxu0 %v698
    %2318 = vmatpush.bf16.msra.mxu0 %v694
    %2319 = vmatmul.bf16.gmra.mxu0 %v2231
    %v2320 = vpop.f32.mrf.mxu0
    %v2321 = vadd.f32 %v166, %v2320
    %v2322 = vpop.f32.mrf.mxu0
    %2323 = vdwg.mxu0
    %2324 = vmatpush.bf16.msra.mxu0 %v754
    %2325 = vmatpush.bf16.msra.mxu0 %v750
    %2326 = vmatpush.bf16.msra.mxu0 %v746
    %2327 = vmatpush.bf16.msra.mxu0 %v742
    %2328 = vmatpush.bf16.msra.mxu0 %v738
    %2329 = vmatpush.bf16.msra.mxu0 %v734
    %2330 = vmatpush.bf16.msra.mxu0 %v730
    %2331 = vmatpush.bf16.msra.mxu0 %v726
    %2332 = vmatmul.bf16.gmra.mxu0 %v2232
    %v2333 = vpop.f32.mrf.mxu0
    %v2334 = vadd.f32 %v2321, %v2333
    %v2335 = vpop.f32.mrf.mxu0
    %2336 = vdwg.mxu0
    %v2337 = vmul.f32 %v2256, 0.5
    %v2338 = vmul.f32 %v2282, 0.5
    %v2339 = vmul.f32 %v2308, 0.5
    %v2340 = vtanh.pop %v2337
    %v2341 = vtanh.pop %v2338
    %v2342 = vtanh.pop %v2339
    %v2343 = vadd.f32 %v2340, 1.0
    %v2344 = vadd.f32 %v2341, 1.0
    %v2345 = vadd.f32 %v2342, 1.0
    %v2346 = vmul.f32 %v2343, 0.5
    %v2347 = vmul.f32 %v2344, 0.5
    %v2348 = vmul.f32 %v2345, 0.5
    %v2349 = vtanh.pop %v2334
    %v2350 = vmul.f32 %v2347, %v2150
    %v2351 = vmul.f32 %v2346, %v2349
    %v2352 = vadd.f32 %v2350, %v2351
    %v2353 = vtanh.pop %v2352
    %v2354 = vmul.f32 %v2348, %v2353
    %v2355 = vld [vmem:[%s6] sm:$0x1]
    %v2357 = vperm.slane %v2355, 0
    %v2359 = vmul.f32 %v2354, %v2357
    %vm2360 = vcmask 1041408
    %v2361 = vsel %vm2360, %v2359, 0.0
    %2362 = vadd.xlane.f32.xlu0 %v2361
    %v2363 = vpop.xlane.xlu0 %2362
    %v2364 = vld [vmem:[#allocation2] sm:$0x1]
    %v2366 = vperm.slane %v2364, 0
    %v2368 = vadd.f32 %v2363, %v2366
    %v2369 = vxor.u32 %v2368, 2147483648
    %v2370 = vmul.f32 %v2369, 1.442695
    %v2371 = vpow.pop %v2370
    %v2372 = vadd.f32 %v2371, 1.0
    %v2373 = vrcp.pop %v2372
    %v2374 = vmul.f32 %v2372, %v2373
    %v2375 = vsub.f32 1.0, %v2374
    %v2376 = vmul.f32 %v2373, %v2375
    %v2377 = vadd.f32 %v2373, %v2376
    %vm2378 = vweird.f32 %v2372
    %vm2379 = vweird.f32 %v2373
    %vm2380 = vmor %vm2378, %vm2379
    %v2381 = vsel %vm2380, %v2373, %v2377
    %v2382 = vand.u32 2147483647, %v2372
    %vm2383 = vcmp.eq.f32.partialorder %v2382, 8.507059e+37
    %v2384 = vand.u32 %v2372, 2147483648
    %v2385 = vor.u32 1.1754944e-38, %v2384
    %v2386 = vsel %vm2383, %v2385, %v2381
    %v2387 = vmul.f32 1.0, %v2386
    %vm2388 = vcmask 1024
    %2389 = vst.msk [vmem:[%s8] sm:$0x3] %vm2388, %v2387
    // Predicated region
    $region42: #{lstm_model_forward.1} parent=1 // pred_check
      _
    $region43: #{lstm_model_forward.1} parent=1 // pred_check_branch
      %2391 = sbr.rel (0) target = $region45
    $region44: #{lstm_model_forward.1} parent=1 // pred_region
      _
    $region45: #{lstm_model_forward.1} parent=1 // pred_fallthru
      _
    // Predicated region
    $region46: #{lstm_model_forward.1} parent=1 // pred_check
      _
    $region47: #{lstm_model_forward.1} parent=1 // pred_check_branch
      %2393 = sbr.rel (0) target = $region49
    $region48: #{lstm_model_forward.1} parent=1 // pred_region
      _
    $region49: #{lstm_model_forward.1} parent=1 // pred_fallthru
      _
    %2394 = vsyncpa [#allocation4], 1
    %2395 = vsyncpa [#allocation6], 1

</llo_original>
